<compile_context>
chip_gen: v5e
topology: v5e:2x2
jax: 0.10.0
libtpu: 0.0.40
codegen_flags: <defaults>
</compile_context>

<pallas_src>
import functools

import jax
import jax.numpy as jnp
import numpy as np
from jax import lax
from jax.experimental import pallas as pl
from jax.experimental.pallas import tpu as pltpu

EPS = 1e-5
_LANE = 128


# ------------------------------ Pallas kernel ------------------------------ #

def _relu_conv_bn_kernel(x_ref, w_ref, shift_ref, mask_ref, o_ref, *,
                         Cin, Cout, W, cols, k, pad, use_mxu):
    """Fused ReLU -> kxk conv (implicit zero padding via roll+mask) -> folded BatchNorm.

    Per grid step (= one lane-batched block of B_blk images):
      x_ref:     (Cin,  cols)       cols = B_blk * M_pad, images concatenated on the lane axis
      w_ref:     (k*k, Cout, Cin)   BN-folded conv weights (bf16 on the MXU path)
      shift_ref: (Cout, 1)          folded BN shift (+ conv bias), f32
      mask_ref:  (k*k, cols)        0/1 boundary masks (tiled per image)
      o_ref:     (Cout, cols)       f32 output
    """
    x = jnp.maximum(x_ref[...], 0.0)                        # fused ReLU, (Cin, cols) f32

    def tap(t):
        # Tap t = (ky, kx): x shifted by the flattened offset s, zeroed outside the image.
        # Rolls that wrap across image / block boundaries only land on mask==0 positions.
        ky, kx = t // k, t % k
        s = (ky - pad) * W + (kx - pad)
        xs = pltpu.roll(x, (-s) % cols, 1) if (s % cols) else x
        return xs * mask_ref[t:t + 1, :]                    # (Cin, cols)

    if use_mxu:
        # Per-tap matmul accumulation: no im2col scratch, bf16 operands, f32 accumulate.
        acc = jnp.zeros((Cout, cols), jnp.float32)
        for t in range(k * k):
            w_t = w_ref[t]                                  # (Cout, Cin) bf16
            acc = acc + jnp.dot(w_t, tap(t).astype(w_t.dtype),
                                preferred_element_type=jnp.float32)
    else:
        # Tiny channel counts: unrolled VPU broadcast-FMA with independent partial
        # accumulators so the 4 VALU slots are not serialized on one dependency chain.
        n_acc = max(1, min(4, k * k * Cin))
        accs = [jnp.zeros((Cout, cols), jnp.float32) for _ in range(n_acc)]
        term = 0
        for t in range(k * k):
            slab = tap(t)                                   # (Cin, cols) f32
            w_t = w_ref[t]                                  # (Cout, Cin) f32
            for ci in range(Cin):
                wc = lax.slice(w_t, (0, ci), (Cout, ci + 1))      # (Cout, 1)
                xr = lax.slice(slab, (ci, 0), (ci + 1, cols))     # (1, cols)
                accs[term % n_acc] = accs[term % n_acc] + wc * xr
                term += 1
        acc = accs[0]
        for a in accs[1:]:
            acc = acc + a

    o_ref[...] = (acc + shift_ref[...]).astype(o_ref.dtype)  # per-channel folded-BN shift


# ------------------------------ host helpers ------------------------------- #

def _fold_conv_bn(w, bias, gamma, beta, mean, var):
    """Fold inference-mode BatchNorm (and optional conv bias) into w / shift."""
    scale = gamma / jnp.sqrt(var + EPS)                      # (Cout,)
    w_f = w * scale[:, None, None, None]
    if bias is None:
        bias = jnp.zeros_like(mean)
    shift = beta + scale * (bias - mean)
    return w_f, shift


def _boundary_masks(H, W, k, pad, M_pad):
    """(k*k, M_pad) float masks: 1 where tap (ky,kx) lands inside the image, 0 elsewhere."""
    ys, xs = np.meshgrid(np.arange(H), np.arange(W), indexing="ij")
    rows = []
    for ky in range(k):
        for kx in range(k):
            dy, dx = ky - pad, kx - pad
            m = ((ys + dy >= 0) & (ys + dy < H) & (xs + dx >= 0) & (xs + dx < W))
            rows.append(np.pad(m.reshape(-1), (0, M_pad - H * W)))
    return np.stack(rows).astype(np.float32)


def _vmem_capacity_bytes():
    try:
        cap = getattr(pltpu.get_tpu_info(), "vmem_capacity_bytes", None)
        if cap:
            return int(cap)
    except Exception:
        pass
    return 64 * 1024 * 1024          # conservative fallback: v7x per-TensorCore VMEM


def _use_mxu(Cin, Cout, k):
    # MXU once both matmul dims are non-trivial (lane-batched columns amortize fill/drain
    # even at low array utilization), or when the unrolled VPU path would get too large.
    # TODO(synk): per-generation retune (v5e's 128-wide MXU breaks even earlier than v6e/v7x).
    return (Cin >= 8 and Cout >= 8) or (k * k * Cin * Cout > 1024)


def _pick_batch_block(N, M_pad, Cin, Cout, k, vmem_cap):
    """Images per grid step + vmem limit, derived from the per-generation VMEM capacity."""
    per_col = (2 * Cin * 4           # input block  (f32, double-buffered)
               + 2 * Cout * 4        # output block (f32, double-buffered)
               + 2 * k * k * 4       # boundary-mask block (constant, budget 2x anyway)
               + 4 * Cin * 4         # relu'd x + roll/tap temporaries
               + 2 * Cout * 4)       # f32 accumulator(s)
    budget = int(0.45 * vmem_cap)    # headroom for double buffers / compiler scratch
    b_cap = max(1, min(N, (budget // per_col) // M_pad))
    if N >= 2:                       # v7x: keep >= 2 grid steps so both TensorCores get work
        b_cap = min(b_cap, (N + 1) // 2)
    best = 1
    for b in range(b_cap, 0, -1):    # prefer a divisor of N (no batch padding)
        if N % b == 0:
            best = b
            break
    b_blk = best if best * 2 >= b_cap else b_cap
    est = per_col * b_blk * M_pad + 2 * k * k * Cout * Cin * 4 + (2 << 20)
    vmem_limit = int(min(int(0.9 * vmem_cap), max(48 << 20, 2 * est)))
    return b_blk, vmem_limit


# --------------------------------- wrapper ---------------------------------- #

def relu_octave_conv_bn_pallas(x_nchw, params, *, kernel_size, stride=1, padding=0):
    """Returned (high-frequency) path of ReLU_OctaveConv_BN for a tensor input.

    params: {"w_h2h": (Cout,Cin,k,k), "b_h2h": (Cout,)|None,
             "bn_h": (gamma, beta, running_mean, running_var)}
    NOTE: the low-frequency branch (conv_h2l / bn_l) is computed by the PyTorch module but
    discarded by its `return x_h`, so it is not computed here.
    """
    assert stride in (1, 2), "OctaveConv only supports stride 1 or 2."
    k = kernel_size
    w = params["w_h2h"]
    Cout, Cin = int(w.shape[0]), int(w.shape[1])
    N, Cx, H, W = (int(d) for d in x_nchw.shape)
    assert Cx == Cin, "tensor-input path requires alpha_in == 0 (conv_h2h sees all channels)"

    h = x_nchw.astype(jnp.float32)
    if stride == 2:
        # OctaveConv high path, stride 2: x_h = AvgPool2d(2,2)(ReLU(x)).  The in-kernel ReLU
        # is then a no-op on the already non-negative pooled values.
        # TODO(synk): fuse this ReLU+AvgPool into the kernel (needs in-kernel lane compaction).
        h = jax.nn.relu(h)
        He, We = (H // 2) * 2, (W // 2) * 2
        h = h[:, :, :He, :We].reshape(N, Cin, He // 2, 2, We // 2, 2).mean(axis=(3, 5))
    _, _, Hc, Wc = (int(d) for d in h.shape)

    # The kernel evaluates the conv on the input grid with implicit zero padding via masks,
    # which covers any padding with 2*padding <= k-1; reduce larger paddings (rare) to that
    # range by materializing only the excess.
    p = padding
    extra = max(0, p - (k - 1) // 2)
    if extra > 0:
        h = jnp.pad(h, ((0, 0), (0, 0), (extra, extra), (extra, extra)))
        p -= extra
        Hc, Wc = Hc + 2 * extra, Wc + 2 * extra

    Ho, Wo = Hc + 2 * p - k + 1, Wc + 2 * p - k + 1
    assert Ho > 0 and Wo > 0

    M = Hc * Wc
    M_pad = ((M + _LANE - 1) // _LANE) * _LANE       # lane-tile aligned per-image stride

    use_mxu = _use_mxu(Cin, Cout, k)
    w_dtype = jnp.bfloat16 if use_mxu else jnp.float32   # bf16 MXU operands, f32 accumulate

    w_f, shift = _fold_conv_bn(w.astype(jnp.float32), params.get("b_h2h"),
                               *[a.astype(jnp.float32) for a in params["bn_h"]])
    w_taps = jnp.transpose(w_f, (2, 3, 0, 1)).reshape(k * k, Cout, Cin).astype(w_dtype)
    shift2d = shift.reshape(Cout, 1)

    vmem_cap = _vmem_capacity_bytes()
    B_blk, vmem_limit = _pick_batch_block(N, M_pad, Cin, Cout, k, vmem_cap)
    N_pad = -(-N // B_blk) * B_blk
    cols = B_blk * M_pad

    # Lane-batched channel-major layout (Cin, N_pad*M_pad): images are contiguous M_pad-column
    # chunks, so the in-kernel roll only ever wraps onto masked (out-of-image) positions.
    h = h.reshape(N, Cin, M)
    if N_pad != N:
        h = jnp.pad(h, ((0, N_pad - N), (0, 0), (0, 0)))
    if M_pad != M:
        h = jnp.pad(h, ((0, 0), (0, 0), (0, M_pad - M)))
    x_cm = jnp.transpose(h, (1, 0, 2)).reshape(Cin, N_pad * M_pad)

    masks = jnp.asarray(np.tile(_boundary_masks(Hc, Wc, k, p, M_pad), (1, B_blk)))

    kernel = functools.partial(_relu_conv_bn_kernel, Cin=Cin, Cout=Cout, W=Wc,
                               cols=cols, k=k, pad=p, use_mxu=use_mxu)

    out_cm = pl.pallas_call(
        kernel,
        out_shape=jax.ShapeDtypeStruct((Cout, N_pad * M_pad), jnp.float32),
        grid=(N_pad // B_blk,),
        in_specs=[
            pl.BlockSpec((Cin, cols), lambda n: (0, n)),
            pl.BlockSpec((k * k, Cout, Cin), lambda n: (0, 0, 0)),  # constant -> DMA'd once
            pl.BlockSpec((Cout, 1), lambda n: (0, 0)),              # constant -> DMA'd once
            pl.BlockSpec((k * k, cols), lambda n: (0, 0)),          # constant -> DMA'd once
        ],
        out_specs=pl.BlockSpec((Cout, cols), lambda n: (0, n)),
        compiler_params=pltpu.CompilerParams(
            dimension_semantics=("parallel",),
            vmem_limit_bytes=vmem_limit),
    )(x_cm, w_taps, shift2d, masks)

    out = out_cm.reshape(Cout, N_pad, M_pad)[:, :N, :M]
    out = jnp.transpose(out, (1, 0, 2)).reshape(N, Cout, Hc, Wc)
    if Ho != Hc or Wo != Wc:
        out = out[:, :, :Ho, :Wo]            # valid (top-left) crop when 2*p < k-1
    return out


# ---------------------------- pure-JAX reference ---------------------------- #

def relu_octave_conv_bn_ref(x_nchw, params, *, kernel_size, stride=1, padding=0):
    h = jax.nn.relu(x_nchw.astype(jnp.float32))
    if stride == 2:
        h = lax.reduce_window(h, 0.0, lax.add, (1, 1, 2, 2), (1, 1, 2, 2), "VALID") * 0.25
    y = lax.conv_general_dilated(
        h, params["w_h2h"].astype(jnp.float32), (1, 1),
        [(padding, padding), (padding, padding)],
        dimension_numbers=("NCHW", "OIHW", "NCHW"),
        precision=lax.Precision.HIGHEST)
    b = params.get("b_h2h")
    if b is not None:
        y = y + b[None, :, None, None]
    gamma, beta, mean, var = [a.astype(jnp.float32) for a in params["bn_h"]]
    inv = gamma / jnp.sqrt(var + EPS)
    return (y - mean[None, :, None, None]) * inv[None, :, None, None] + beta[None, :, None, None]


# ----------------------------------- main ----------------------------------- #

def _make_params(key, Cin_h, Cout_h, k):
    ks = jax.random.split(key, 5)
    return {
        "w_h2h": 0.1 * jax.random.normal(ks[0], (Cout_h, Cin_h, k, k), jnp.float32),
        "b_h2h": None,                                   # bias=False (module default)
        "bn_h": (
            jax.random.uniform(ks[1], (Cout_h,), jnp.float32, 0.5, 1.5),   # gamma
            0.1 * jax.random.normal(ks[2], (Cout_h,), jnp.float32),        # beta
            0.1 * jax.random.normal(ks[3], (Cout_h,), jnp.float32),        # running_mean
            jax.random.uniform(ks[4], (Cout_h,), jnp.float32, 0.5, 1.5),   # running_var
        ),
    }


if __name__ == "__main__":
    key = jax.random.PRNGKey(0)
    alpha_out = 0.5              # alpha_in = 0 (tensor-input path of OctaveConv)
    # (N, in_ch, out_ch, k, stride, padding, H, W)
    configs = [
        (8, 8, 16, 3, 1, 1, 16, 16),   # MXU path, lane-batched (B_blk=4 -> 1024-col matmuls)
        (2, 8, 8, 3, 2, 0, 32, 32),    # stride-2 AvgPool + valid crop        (VPU path)
        (2, 4, 8, 3, 1, 1, 16, 16),    # tiny channel counts                  (VPU path)
    ]
    for (N, cin, cout, k, stride, pad, H, W) in configs:
        key, kx, kp = jax.random.split(key, 3)
        cout_h = cout - int(alpha_out * cout)            # high-frequency output channels
        x = jax.random.normal(kx, (N, cin, H, W), jnp.float32)
        params = _make_params(kp, cin, cout_h, k)

        out = jax.block_until_ready(
            relu_octave_conv_bn_pallas(x, params, kernel_size=k, stride=stride, padding=pad))
        ref = jax.block_until_ready(
            relu_octave_conv_bn_ref(x, params, kernel_size=k, stride=stride, padding=pad))
        # bf16 MXU operands (f32 accumulate) vs the f32 HIGHEST-precision reference.
        tol = 2e-2 if _use_mxu(cin, cout_h, k) else 1e-3
        np.testing.assert_allclose(np.asarray(out), np.asarray(ref), rtol=tol, atol=tol)
    print("KERNEL_OK")
</pallas_src>

<mosaic_0001>
module attributes {stable_mosaic.version = 11 : i64} {
  func.func @_relu_conv_bn_kernel(%arg0: i32, %arg1: memref<8x1024xf32, #tpu.memory_space<vmem>>, %arg2: memref<9x8x8xbf16, #tpu.memory_space<vmem>>, %arg3: memref<8x1xf32, #tpu.memory_space<vmem>>, %arg4: memref<9x1024xf32, #tpu.memory_space<vmem>>, %arg5: memref<8x1024xf32, #tpu.memory_space<vmem>>) attributes {dimension_semantics = [#tpu.dimension_semantics<parallel>], iteration_bounds = array<i64: 2>, scalar_prefetch = 0 : i64, scratch_operands = 0 : i64, tpu.core_type = #tpu.core_type<tc>, window_params = [{transform_indices = @transform_0, window_bounds = array<i64: 8, 1024>}, {pipeline_mode = #tpu.pipeline_mode<synchronous>, transform_indices = @transform_1, window_bounds = array<i64: 9, 8, 8>}, {pipeline_mode = #tpu.pipeline_mode<synchronous>, transform_indices = @transform_2, window_bounds = array<i64: 8, 1>}, {pipeline_mode = #tpu.pipeline_mode<synchronous>, transform_indices = @transform_3, window_bounds = array<i64: 9, 1024>}, {transform_indices = @transform_4, window_bounds = array<i64: 8, 1024>}]} {
    %c0 = arith.constant 0 : index
    %c0_0 = arith.constant 0 : index
    %0 = vector.load %arg1[%c0, %c0_0] : memref<8x1024xf32, #tpu.memory_space<vmem>>, vector<8x1024xf32>
    %cst = arith.constant 0.000000e+00 : f32
    %1 = vector.broadcast %cst : f32 to vector<8x1024xf32>
    %2 = arith.maximumf %0, %1 : vector<8x1024xf32>
    %cst_1 = arith.constant 0.000000e+00 : f32
    %3 = vector.broadcast %cst_1 : f32 to vector<8x1024xf32>
    %c0_2 = arith.constant 0 : index
    %c0_3 = arith.constant 0 : index
    %c0_4 = arith.constant 0 : index
    %4 = vector.load %arg2[%c0_2, %c0_3, %c0_4] : memref<9x8x8xbf16, #tpu.memory_space<vmem>>, vector<1x8x8xbf16>
    %5 = vector.shape_cast %4 : vector<1x8x8xbf16> to vector<8x8xbf16>
    %c17_i32 = arith.constant 17 : i32
    %6 = tpu.dynamic_rotate %2 by %c17_i32 dim 1 : vector<8x1024xf32>, i32 -> vector<8x1024xf32>
    %c0_5 = arith.constant 0 : index
    %c0_6 = arith.constant 0 : index
    %7 = vector.load %arg4[%c0_5, %c0_6] : memref<9x1024xf32, #tpu.memory_space<vmem>>, vector<1x1024xf32>
    %8 = vector.broadcast %7 : vector<1x1024xf32> to vector<8x1024xf32>
    %9 = arith.mulf %6, %8 : vector<8x1024xf32>
    %10 = arith.truncf %9 : vector<8x1024xf32> to vector<8x1024xbf16>
    %cst_7 = arith.constant dense<0.000000e+00> : vector<8x1024xf32>
    %11 = tpu.matmul %5, %10, %cst_7 {dimension_numbers = #tpu.dot_dimension_numbers<[1], [0], [0], [1], [0, 0, 1, 1], [], []>} : vector<8x8xbf16>, vector<8x1024xbf16>, vector<8x1024xf32> -> vector<8x1024xf32>
    %12 = arith.addf %3, %11 : vector<8x1024xf32>
    %c1 = arith.constant 1 : index
    %c0_8 = arith.constant 0 : index
    %c0_9 = arith.constant 0 : index
    %13 = vector.load %arg2[%c1, %c0_8, %c0_9] : memref<9x8x8xbf16, #tpu.memory_space<vmem>>, vector<1x8x8xbf16>
    %14 = vector.shape_cast %13 : vector<1x8x8xbf16> to vector<8x8xbf16>
    %c16_i32 = arith.constant 16 : i32
    %15 = tpu.dynamic_rotate %2 by %c16_i32 dim 1 : vector<8x1024xf32>, i32 -> vector<8x1024xf32>
    %c1_10 = arith.constant 1 : index
    %c0_11 = arith.constant 0 : index
    %16 = vector.load %arg4[%c1_10, %c0_11] : memref<9x1024xf32, #tpu.memory_space<vmem>>, vector<1x1024xf32>
    %17 = vector.broadcast %16 : vector<1x1024xf32> to vector<8x1024xf32>
    %18 = arith.mulf %15, %17 : vector<8x1024xf32>
    %19 = arith.truncf %18 : vector<8x1024xf32> to vector<8x1024xbf16>
    %cst_12 = arith.constant dense<0.000000e+00> : vector<8x1024xf32>
    %20 = tpu.matmul %14, %19, %cst_12 {dimension_numbers = #tpu.dot_dimension_numbers<[1], [0], [0], [1], [0, 0, 1, 1], [], []>} : vector<8x8xbf16>, vector<8x1024xbf16>, vector<8x1024xf32> -> vector<8x1024xf32>
    %21 = arith.addf %12, %20 : vector<8x1024xf32>
    %c2 = arith.constant 2 : index
    %c0_13 = arith.constant 0 : index
    %c0_14 = arith.constant 0 : index
    %22 = vector.load %arg2[%c2, %c0_13, %c0_14] : memref<9x8x8xbf16, #tpu.memory_space<vmem>>, vector<1x8x8xbf16>
    %23 = vector.shape_cast %22 : vector<1x8x8xbf16> to vector<8x8xbf16>
    %c15_i32 = arith.constant 15 : i32
    %24 = tpu.dynamic_rotate %2 by %c15_i32 dim 1 : vector<8x1024xf32>, i32 -> vector<8x1024xf32>
    %c2_15 = arith.constant 2 : index
    %c0_16 = arith.constant 0 : index
    %25 = vector.load %arg4[%c2_15, %c0_16] : memref<9x1024xf32, #tpu.memory_space<vmem>>, vector<1x1024xf32>
    %26 = vector.broadcast %25 : vector<1x1024xf32> to vector<8x1024xf32>
    %27 = arith.mulf %24, %26 : vector<8x1024xf32>
    %28 = arith.truncf %27 : vector<8x1024xf32> to vector<8x1024xbf16>
    %cst_17 = arith.constant dense<0.000000e+00> : vector<8x1024xf32>
    %29 = tpu.matmul %23, %28, %cst_17 {dimension_numbers = #tpu.dot_dimension_numbers<[1], [0], [0], [1], [0, 0, 1, 1], [], []>} : vector<8x8xbf16>, vector<8x1024xbf16>, vector<8x1024xf32> -> vector<8x1024xf32>
    %30 = arith.addf %21, %29 : vector<8x1024xf32>
    %c3 = arith.constant 3 : index
    %c0_18 = arith.constant 0 : index
    %c0_19 = arith.constant 0 : index
    %31 = vector.load %arg2[%c3, %c0_18, %c0_19] : memref<9x8x8xbf16, #tpu.memory_space<vmem>>, vector<1x8x8xbf16>
    %32 = vector.shape_cast %31 : vector<1x8x8xbf16> to vector<8x8xbf16>
    %c1_i32 = arith.constant 1 : i32
    %33 = tpu.dynamic_rotate %2 by %c1_i32 dim 1 : vector<8x1024xf32>, i32 -> vector<8x1024xf32>
    %c3_20 = arith.constant 3 : index
    %c0_21 = arith.constant 0 : index
    %34 = vector.load %arg4[%c3_20, %c0_21] : memref<9x1024xf32, #tpu.memory_space<vmem>>, vector<1x1024xf32>
    %35 = vector.broadcast %34 : vector<1x1024xf32> to vector<8x1024xf32>
    %36 = arith.mulf %33, %35 : vector<8x1024xf32>
    %37 = arith.truncf %36 : vector<8x1024xf32> to vector<8x1024xbf16>
    %cst_22 = arith.constant dense<0.000000e+00> : vector<8x1024xf32>
    %38 = tpu.matmul %32, %37, %cst_22 {dimension_numbers = #tpu.dot_dimension_numbers<[1], [0], [0], [1], [0, 0, 1, 1], [], []>} : vector<8x8xbf16>, vector<8x1024xbf16>, vector<8x1024xf32> -> vector<8x1024xf32>
    %39 = arith.addf %30, %38 : vector<8x1024xf32>
    %c4 = arith.constant 4 : index
    %c0_23 = arith.constant 0 : index
    %c0_24 = arith.constant 0 : index
    %40 = vector.load %arg2[%c4, %c0_23, %c0_24] : memref<9x8x8xbf16, #tpu.memory_space<vmem>>, vector<1x8x8xbf16>
    %41 = vector.shape_cast %40 : vector<1x8x8xbf16> to vector<8x8xbf16>
    %c4_25 = arith.constant 4 : index
    %c0_26 = arith.constant 0 : index
    %42 = vector.load %arg4[%c4_25, %c0_26] : memref<9x1024xf32, #tpu.memory_space<vmem>>, vector<1x1024xf32>
    %43 = vector.broadcast %42 : vector<1x1024xf32> to vector<8x1024xf32>
    %44 = arith.mulf %2, %43 : vector<8x1024xf32>
    %45 = arith.truncf %44 : vector<8x1024xf32> to vector<8x1024xbf16>
    %cst_27 = arith.constant dense<0.000000e+00> : vector<8x1024xf32>
    %46 = tpu.matmul %41, %45, %cst_27 {dimension_numbers = #tpu.dot_dimension_numbers<[1], [0], [0], [1], [0, 0, 1, 1], [], []>} : vector<8x8xbf16>, vector<8x1024xbf16>, vector<8x1024xf32> -> vector<8x1024xf32>
    %47 = arith.addf %39, %46 : vector<8x1024xf32>
    %c5 = arith.constant 5 : index
    %c0_28 = arith.constant 0 : index
    %c0_29 = arith.constant 0 : index
    %48 = vector.load %arg2[%c5, %c0_28, %c0_29] : memref<9x8x8xbf16, #tpu.memory_space<vmem>>, vector<1x8x8xbf16>
    %49 = vector.shape_cast %48 : vector<1x8x8xbf16> to vector<8x8xbf16>
    %c1023_i32 = arith.constant 1023 : i32
    %50 = tpu.dynamic_rotate %2 by %c1023_i32 dim 1 : vector<8x1024xf32>, i32 -> vector<8x1024xf32>
    %c5_30 = arith.constant 5 : index
    %c0_31 = arith.constant 0 : index
    %51 = vector.load %arg4[%c5_30, %c0_31] : memref<9x1024xf32, #tpu.memory_space<vmem>>, vector<1x1024xf32>
    %52 = vector.broadcast %51 : vector<1x1024xf32> to vector<8x1024xf32>
    %53 = arith.mulf %50, %52 : vector<8x1024xf32>
    %54 = arith.truncf %53 : vector<8x1024xf32> to vector<8x1024xbf16>
    %cst_32 = arith.constant dense<0.000000e+00> : vector<8x1024xf32>
    %55 = tpu.matmul %49, %54, %cst_32 {dimension_numbers = #tpu.dot_dimension_numbers<[1], [0], [0], [1], [0, 0, 1, 1], [], []>} : vector<8x8xbf16>, vector<8x1024xbf16>, vector<8x1024xf32> -> vector<8x1024xf32>
    %56 = arith.addf %47, %55 : vector<8x1024xf32>
    %c6 = arith.constant 6 : index
    %c0_33 = arith.constant 0 : index
    %c0_34 = arith.constant 0 : index
    %57 = vector.load %arg2[%c6, %c0_33, %c0_34] : memref<9x8x8xbf16, #tpu.memory_space<vmem>>, vector<1x8x8xbf16>
    %58 = vector.shape_cast %57 : vector<1x8x8xbf16> to vector<8x8xbf16>
    %c1009_i32 = arith.constant 1009 : i32
    %59 = tpu.dynamic_rotate %2 by %c1009_i32 dim 1 : vector<8x1024xf32>, i32 -> vector<8x1024xf32>
    %c6_35 = arith.constant 6 : index
    %c0_36 = arith.constant 0 : index
    %60 = vector.load %arg4[%c6_35, %c0_36] : memref<9x1024xf32, #tpu.memory_space<vmem>>, vector<1x1024xf32>
    %61 = vector.broadcast %60 : vector<1x1024xf32> to vector<8x1024xf32>
    %62 = arith.mulf %59, %61 : vector<8x1024xf32>
    %63 = arith.truncf %62 : vector<8x1024xf32> to vector<8x1024xbf16>
    %cst_37 = arith.constant dense<0.000000e+00> : vector<8x1024xf32>
    %64 = tpu.matmul %58, %63, %cst_37 {dimension_numbers = #tpu.dot_dimension_numbers<[1], [0], [0], [1], [0, 0, 1, 1], [], []>} : vector<8x8xbf16>, vector<8x1024xbf16>, vector<8x1024xf32> -> vector<8x1024xf32>
    %65 = arith.addf %56, %64 : vector<8x1024xf32>
    %c7 = arith.constant 7 : index
    %c0_38 = arith.constant 0 : index
    %c0_39 = arith.constant 0 : index
    %66 = vector.load %arg2[%c7, %c0_38, %c0_39] : memref<9x8x8xbf16, #tpu.memory_space<vmem>>, vector<1x8x8xbf16>
    %67 = vector.shape_cast %66 : vector<1x8x8xbf16> to vector<8x8xbf16>
    %c1008_i32 = arith.constant 1008 : i32
    %68 = tpu.dynamic_rotate %2 by %c1008_i32 dim 1 : vector<8x1024xf32>, i32 -> vector<8x1024xf32>
    %c7_40 = arith.constant 7 : index
    %c0_41 = arith.constant 0 : index
    %69 = vector.load %arg4[%c7_40, %c0_41] : memref<9x1024xf32, #tpu.memory_space<vmem>>, vector<1x1024xf32>
    %70 = vector.broadcast %69 : vector<1x1024xf32> to vector<8x1024xf32>
    %71 = arith.mulf %68, %70 : vector<8x1024xf32>
    %72 = arith.truncf %71 : vector<8x1024xf32> to vector<8x1024xbf16>
    %cst_42 = arith.constant dense<0.000000e+00> : vector<8x1024xf32>
    %73 = tpu.matmul %67, %72, %cst_42 {dimension_numbers = #tpu.dot_dimension_numbers<[1], [0], [0], [1], [0, 0, 1, 1], [], []>} : vector<8x8xbf16>, vector<8x1024xbf16>, vector<8x1024xf32> -> vector<8x1024xf32>
    %74 = arith.addf %65, %73 : vector<8x1024xf32>
    %c8 = arith.constant 8 : index
    %c0_43 = arith.constant 0 : index
    %c0_44 = arith.constant 0 : index
    %75 = vector.load %arg2[%c8, %c0_43, %c0_44] : memref<9x8x8xbf16, #tpu.memory_space<vmem>>, vector<1x8x8xbf16>
    %76 = vector.shape_cast %75 : vector<1x8x8xbf16> to vector<8x8xbf16>
    %c1007_i32 = arith.constant 1007 : i32
    %77 = tpu.dynamic_rotate %2 by %c1007_i32 dim 1 : vector<8x1024xf32>, i32 -> vector<8x1024xf32>
    %c8_45 = arith.constant 8 : index
    %c0_46 = arith.constant 0 : index
    %78 = vector.load %arg4[%c8_45, %c0_46] : memref<9x1024xf32, #tpu.memory_space<vmem>>, vector<1x1024xf32>
    %79 = vector.broadcast %78 : vector<1x1024xf32> to vector<8x1024xf32>
    %80 = arith.mulf %77, %79 : vector<8x1024xf32>
    %81 = arith.truncf %80 : vector<8x1024xf32> to vector<8x1024xbf16>
    %cst_47 = arith.constant dense<0.000000e+00> : vector<8x1024xf32>
    %82 = tpu.matmul %76, %81, %cst_47 {dimension_numbers = #tpu.dot_dimension_numbers<[1], [0], [0], [1], [0, 0, 1, 1], [], []>} : vector<8x8xbf16>, vector<8x1024xbf16>, vector<8x1024xf32> -> vector<8x1024xf32>
    %83 = arith.addf %74, %82 : vector<8x1024xf32>
    %c0_48 = arith.constant 0 : index
    %c0_49 = arith.constant 0 : index
    %84 = vector.load %arg3[%c0_48, %c0_49] : memref<8x1xf32, #tpu.memory_space<vmem>>, vector<8x1xf32>
    %85 = vector.broadcast %84 : vector<8x1xf32> to vector<8x1024xf32>
    %86 = arith.addf %83, %85 : vector<8x1024xf32>
    %c0_50 = arith.constant 0 : index
    %c0_51 = arith.constant 0 : index
    %87 = vector.load %arg5[%c0_50, %c0_51] : memref<8x1024xf32, #tpu.memory_space<vmem>>, vector<8x1024xf32>
    tpu.vector_store %arg5[%c0_50, %c0_51], %86 {strides = array<i32>} : memref<8x1024xf32, #tpu.memory_space<vmem>>, vector<8x1024xf32>,
    return
  }
  func.func @transform_0(%arg0: i32) -> (i32, i32) {
    %c0_i32 = arith.constant 0 : i32
    %c0_i32_0 = arith.constant 0 : i32
    return %c0_i32, %arg0 : i32, i32
  }
  func.func @transform_1(%arg0: i32) -> (i32, i32, i32) {
    %c0_i32 = arith.constant 0 : i32
    %c0_i32_0 = arith.constant 0 : i32
    %c0_i32_1 = arith.constant 0 : i32
    %c0_i32_2 = arith.constant 0 : i32
    return %c0_i32, %c0_i32_0, %c0_i32_1 : i32, i32, i32
  }
  func.func @transform_2(%arg0: i32) -> (i32, i32) {
    %c0_i32 = arith.constant 0 : i32
    %c0_i32_0 = arith.constant 0 : i32
    %c0_i32_1 = arith.constant 0 : i32
    return %c0_i32, %c0_i32_0 : i32, i32
  }
  func.func @transform_3(%arg0: i32) -> (i32, i32) {
    %c0_i32 = arith.constant 0 : i32
    %c0_i32_0 = arith.constant 0 : i32
    %c0_i32_1 = arith.constant 0 : i32
    return %c0_i32, %c0_i32_0 : i32, i32
  }
  func.func @transform_4(%arg0: i32) -> (i32, i32) {
    %c0_i32 = arith.constant 0 : i32
    %c0_i32_0 = arith.constant 0 : i32
    return %c0_i32, %arg0 : i32, i32
  }
}

</mosaic_0001>

<llo_original>
// kernel: tpu_custom_call.1
$region0: #{tpu_custom_call.1}
  #allocation0 [shape = 'u32[]', space=smem, size = 0x4, offset = 0x4, fixed_abs, tag = 'smem constant byte address 0x4 - core index']
  #allocation1 [shape = 'u32[72,128]{1,0:T(1,128)}', space=vmem, size = 0x9000, scoped, tag = 'internal scratch']
  %s0 = inlined_call_operand.hbm [shape: f32[8,2048], index: 0, kind: input, shape index: {}]
  %s1 = inlined_call_operand.vmem [shape: bf16[9,8,8], index: 1, kind: input, shape index: {}]
  %s2 = inlined_call_operand.vmem [shape: f32[8,1], index: 2, kind: input, shape index: {}]
  %s3 = inlined_call_operand.hbm [shape: f32[9,1024], index: 3, kind: input, shape index: {}]
  %s4 = inlined_call_operand.hbm [shape: f32[8,2048], index: 4, kind: output, shape index: {}]
  %s5 = sld [smem:[#allocation0]]
  $region57: #{tpu_custom_call.1} parent=0
    _
  %s7 = ssub.s32 1, %s5
  %s8 = scalar_select 0, %s7, %s5
  $region1: #{tpu_custom_call.1} parent=0
    #allocation2 [shape = 'u8[65536]{0}', space=vmem, size = 0x10000, scoped, tag = 'input window, operand 0']
    #allocation3 [shape = 's32[2]{0}', space=sflag, size = 0x8, scoped, tag = 'scoped memory for tpu_custom_call.1']
    #allocation4 [shape = 's32[2]{0}', space=sflag, size = 0x8, scoped, tag = 'scoped memory for tpu_custom_call.1']
    #allocation5 [shape = 'u8[65536]{0}', space=vmem, size = 0x10000, scoped, tag = 'input window, operand 3, single buffered']
    #allocation6 [shape = 's32[1]{0}', space=sflag, size = 0x4, scoped, tag = 'scoped memory for tpu_custom_call.1']
    #allocation7 [shape = 'u8[65536]{0}', space=vmem, size = 0x10000, scoped, tag = 'output window, operand 0']
    %9 = vsyncpa [#allocation3], 0
    %s10 = scalar_lea.sflag [#allocation3], 1
    %11 = vsyncpa %s10, 0
    %12 = vsyncpa [#allocation6], 0
    %13 = vsyncpa [#allocation4], 0
    %s14 = scalar_lea.sflag [#allocation4], 1
    %15 = vsyncpa %s14, 0
    loop: start=0, step=1, limit=4
    $region2: #{tpu_custom_call.1} parent=1 // loop_pre_header
      _
    $region3: #{tpu_custom_call.1} parent=1 // loop_header
      %s17 = sphi 0, %s21
      %p18 = scmp.ge.s32.totalorder %s17, 4
      %s27 = sphi 0, %s29
      %s30 = sphi 0, %s27
      %s31 = sphi 0, %s30
      %s47 = sphi 0, %s31
      %s51 = sphi 0, %s51
      %s53 = sphi 0, %s51
      %s54 = sphi 0, %s53
      %s68 = sphi 0, %s54
      %s72 = sphi 0, %s72
      %s74 = sphi 0, %s72
      %s75 = sphi 0, %s74
      %s89 = sphi 0, %s75
      %s93 = sphi 0, %s93
      %s95 = sphi 0, %s93
      %s96 = sphi 0, %s95
      %s110 = sphi 0, %s96
      %s116 = sphi 0, %s118
      %s119 = sphi 0, %s116
      %s120 = sphi 0, %s119
      %s136 = sphi 0, %s120
    $region4: #{tpu_custom_call.1} parent=1 // loop_header_branch
      %20 = sbr.rel (%p18) target = $region8
    $region5: #{tpu_custom_call.1} parent=1 // loop_body
      %s22 = ssub.s32 %s17, 1
      %s23 = ssub.s32 %s17, 2
      %s24 = sadd.s32 %s17, 1
      %s25 = ssub.s32 %s17, %s24
      %p26 = scmp.eq.s32.totalorder %s25, 0
      %s28 = sadd.s32 %s27, 1
      %s29 = scalar_select %p26, %s27, %s28
      %p32 = pneg %p26
      %p33 = scmp.eq.s32.totalorder %s17, 1
      %p34 = por %p32, %p33
      %p35 = scmp.ne.s32.totalorder %s27, %s30
      %p36 = scmp.eq.s32.totalorder %s17, 0
      %p37 = por %p35, %p36
      %p38 = scmp.ne.s32.totalorder %s27, %s30
      %p39 = scmp.eq.s32.totalorder %s22, 1
      %p40 = por %p38, %p39
      %p41 = scmp.ne.s32.totalorder %s30, %s31
      %p42 = scmp.eq.s32.totalorder %s22, 0
      %p43 = por %p41, %p42
      %p44 = scmp.ne.s32.totalorder %s30, %s31
      %p45 = scmp.eq.s32.totalorder %s23, 1
      %p46 = por %p44, %p45
      %p48 = scmp.ne.s32.totalorder %s31, %s47
      %p49 = scmp.eq.s32.totalorder %s23, 0
      %p50 = por %p48, %p49
      %s52 = sadd.s32 %s51, 1
      %p55 = scmp.eq.s32.totalorder %s17, 1
      %p56 = scmp.ne.s32.totalorder %s51, %s53
      %p57 = scmp.eq.s32.totalorder %s17, 0
      %p58 = por %p56, %p57
      %p59 = scmp.ne.s32.totalorder %s51, %s53
      %p60 = scmp.eq.s32.totalorder %s22, 1
      %p61 = por %p59, %p60
      %p62 = scmp.ne.s32.totalorder %s53, %s54
      %p63 = scmp.eq.s32.totalorder %s22, 0
      %p64 = por %p62, %p63
      %p65 = scmp.ne.s32.totalorder %s53, %s54
      %p66 = scmp.eq.s32.totalorder %s23, 1
      %p67 = por %p65, %p66
      %p69 = scmp.ne.s32.totalorder %s54, %s68
      %p70 = scmp.eq.s32.totalorder %s23, 0
      %p71 = por %p69, %p70
      %s73 = sadd.s32 %s72, 1
      %p76 = scmp.eq.s32.totalorder %s17, 1
      %p77 = scmp.ne.s32.totalorder %s72, %s74
      %p78 = scmp.eq.s32.totalorder %s17, 0
      %p79 = por %p77, %p78
      %p80 = scmp.ne.s32.totalorder %s72, %s74
      %p81 = scmp.eq.s32.totalorder %s22, 1
      %p82 = por %p80, %p81
      %p83 = scmp.ne.s32.totalorder %s74, %s75
      %p84 = scmp.eq.s32.totalorder %s22, 0
      %p85 = por %p83, %p84
      %p86 = scmp.ne.s32.totalorder %s74, %s75
      %p87 = scmp.eq.s32.totalorder %s23, 1
      %p88 = por %p86, %p87
      %p90 = scmp.ne.s32.totalorder %s75, %s89
      %p91 = scmp.eq.s32.totalorder %s23, 0
      %p92 = por %p90, %p91
      %s94 = sadd.s32 %s93, 1
      %p97 = scmp.eq.s32.totalorder %s17, 1
      %p98 = scmp.ne.s32.totalorder %s93, %s95
      %p99 = scmp.eq.s32.totalorder %s17, 0
      %p100 = por %p98, %p99
      %p101 = scmp.ne.s32.totalorder %s93, %s95
      %p102 = scmp.eq.s32.totalorder %s22, 1
      %p103 = por %p101, %p102
      %p104 = scmp.ne.s32.totalorder %s95, %s96
      %p105 = scmp.eq.s32.totalorder %s22, 0
      %p106 = por %p104, %p105
      %p107 = scmp.ne.s32.totalorder %s95, %s96
      %p108 = scmp.eq.s32.totalorder %s23, 1
      %p109 = por %p107, %p108
      %p111 = scmp.ne.s32.totalorder %s96, %s110
      %p112 = scmp.eq.s32.totalorder %s23, 0
      %p113 = por %p111, %p112
      %s114 = ssub.s32 %s17, %s24
      %p115 = scmp.eq.s32.totalorder %s114, 0
      %s117 = sadd.s32 %s116, 1
      %s118 = scalar_select %p115, %s116, %s117
      %p121 = pneg %p115
      %p122 = scmp.eq.s32.totalorder %s17, 1
      %p123 = por %p121, %p122
      %p124 = scmp.ne.s32.totalorder %s116, %s119
      %p125 = scmp.eq.s32.totalorder %s17, 0
      %p126 = por %p124, %p125
      %p127 = scmp.ne.s32.totalorder %s116, %s119
      %p128 = scmp.eq.s32.totalorder %s22, 1
      %p129 = por %p127, %p128
      %p130 = scmp.ne.s32.totalorder %s119, %s120
      %p131 = scmp.eq.s32.totalorder %s22, 0
      %p132 = por %p130, %p131
      %p133 = scmp.ne.s32.totalorder %s119, %s120
      %p134 = scmp.eq.s32.totalorder %s23, 1
      %p135 = por %p133, %p134
      %p137 = scmp.ne.s32.totalorder %s120, %s136
      %p138 = scmp.eq.s32.totalorder %s23, 0
      %p139 = por %p137, %p138
      %p140 = scmp.le.s32.totalorder 1, %s17
      %p141 = scmp.lt.s32.totalorder %s17, 3
      %p142 = pnand %p140, %p141
      %p143 = pneg %p142
      // Predicated region
      $region9: #{tpu_custom_call.1} parent=5 // pred_check
        _
      $region10: #{tpu_custom_call.1} parent=5 // pred_check_branch
        %145 = sbr.rel (%p142) target = $region12
      $region11: #{tpu_custom_call.1} parent=5 // pred_region
        %s146 = ssub.s32 %s17, 1
        // Predicated region
        $region13: #{tpu_custom_call.1} parent=11 // pred_check
          %p147 = pneg %p64
        $region14: #{tpu_custom_call.1} parent=11 // pred_check_branch
          %149 = sbr.rel (%p147) target = $region16
        $region15: #{tpu_custom_call.1} parent=11 // pred_region
          _
        $region16: #{tpu_custom_call.1} parent=11 // pred_fallthru
          _
        // Predicated region
        $region17: #{tpu_custom_call.1} parent=11 // pred_check
          %p150 = pneg %p85
        $region18: #{tpu_custom_call.1} parent=11 // pred_check_branch
          %152 = sbr.rel (%p150) target = $region20
        $region19: #{tpu_custom_call.1} parent=11 // pred_region
          _
        $region20: #{tpu_custom_call.1} parent=11 // pred_fallthru
          _
        // Predicated region
        $region21: #{tpu_custom_call.1} parent=11 // pred_check
          %p153 = pneg %p106
        $region22: #{tpu_custom_call.1} parent=11 // pred_check_branch
          %155 = sbr.rel (%p153) target = $region24
        $region23: #{tpu_custom_call.1} parent=11 // pred_region
          %157 = vsyncadd [#allocation6], 0
          %s158 = sshll.u32 %s3, 4
          %s159 = int_to_ptr.hbm [resolvable:$true] %s158
          %s160 = sshll.u32 [#allocation5], 4
          %s161 = int_to_ptr.vmem [resolvable:$true] %s160
          %166 = dma.hbm_to_vmem [thread:$0]  %s159, 2048, %s161, [#allocation6], 1024, 1024, 64
        $region24: #{tpu_custom_call.1} parent=11 // pred_fallthru
          _
      $region12: #{tpu_custom_call.1} parent=5 // pred_fallthru
        _
      %p167 = scmp.lt.s32.totalorder %s17, 2
      // Predicated region
      $region25: #{tpu_custom_call.1} parent=5 // pred_check
        %p168 = pneg %p167
      $region26: #{tpu_custom_call.1} parent=5 // pred_check_branch
        %170 = sbr.rel (%p168) target = $region28
      $region27: #{tpu_custom_call.1} parent=5 // pred_region
        // Predicated region
        $region29: #{tpu_custom_call.1} parent=27 // pred_check
          %p171 = pneg %p37
        $region30: #{tpu_custom_call.1} parent=27 // pred_check_branch
          %173 = sbr.rel (%p171) target = $region32
        $region31: #{tpu_custom_call.1} parent=27 // pred_region
          %s174 = sand.u32 %s27, 1
          %s175 = scalar_lea.sflag [#allocation3], %s174
          %s176 = sand.u32 %s27, 1
          %s177 = smul.addr %s176, 64
          %s178 = scalar_lea.vmem [#allocation2], %s177
          %s179 = smul.u32 8, %s17
          %181 = vsyncadd %s175, 0
          %s182 = smul.addr %s179, 8
          %s183 = scalar_lea.hbm %s0, %s182
          %s185 = sshll.u32 %s183, 4
          %s186 = int_to_ptr.hbm [resolvable:$true] %s185
          %s187 = sshll.u32 %s178, 4
          %s188 = int_to_ptr.vmem [resolvable:$true] %s187
          %190 = dma.hbm_to_vmem [thread:$0]  %s186, 1024, %s188, %s175
        $region32: #{tpu_custom_call.1} parent=27 // pred_fallthru
          _
      $region28: #{tpu_custom_call.1} parent=5 // pred_fallthru
        _
      %p191 = scmp.le.s32.totalorder 1, %s17
      %p192 = scmp.lt.s32.totalorder %s17, 3
      %p193 = pnand %p191, %p192
      %p194 = pneg %p193
      // Predicated region
      $region33: #{tpu_custom_call.1} parent=5 // pred_check
        _
      $region34: #{tpu_custom_call.1} parent=5 // pred_check_branch
        %196 = sbr.rel (%p193) target = $region36
      $region35: #{tpu_custom_call.1} parent=5 // pred_region
        %s197 = ssub.s32 %s17, 1
        %s198 = sand.u32 %s30, 1
        %s199 = scalar_lea.sflag [#allocation3], %s198
        %s200 = sand.u32 %s30, 1
        %s201 = smul.addr %s200, 64
        %s202 = scalar_lea.vmem [#allocation2], %s201
        // Predicated region
        $region37: #{tpu_custom_call.1} parent=35 // pred_check
          %p203 = pneg %p43
        $region38: #{tpu_custom_call.1} parent=35 // pred_check_branch
          %205 = sbr.rel (%p203) target = $region40
        $region39: #{tpu_custom_call.1} parent=35 // pred_region
          %207 = dma.done %s199, 1024
        $region40: #{tpu_custom_call.1} parent=35 // pred_fallthru
          _
        // Predicated region
        $region41: #{tpu_custom_call.1} parent=35 // pred_check
          %p208 = pneg %p106
        $region42: #{tpu_custom_call.1} parent=35 // pred_check_branch
          %210 = sbr.rel (%p208) target = $region44
        $region43: #{tpu_custom_call.1} parent=35 // pred_region
          %212 = dma.done [#allocation6], 2048
        $region44: #{tpu_custom_call.1} parent=35 // pred_fallthru
          _
        %s213 = sand.u32 %s30, 1
        %s214 = scalar_lea.sflag [#allocation3], %s213
        %s215 = sand.u32 %s30, 1
        %s216 = smul.addr %s215, 64
        %s217 = scalar_lea.vmem [#allocation2], %s216
        %p218 = pneg %p43
        %p219 = pneg %p40
        %p220 = pneg %p64
        %p221 = pneg %p61
        %p222 = pneg %p85
        %p223 = pneg %p82
        %p224 = pneg %p106
        %p225 = pneg %p103
        %p226 = pneg %p132
        %p227 = pneg %p129
        %s228 = sand.u32 %s119, 1
        %s229 = scalar_lea.sflag [#allocation4], %s228
        %s230 = sand.u32 %s119, 1
        %s231 = smul.addr %s230, 64
        %s232 = scalar_lea.vmem [#allocation7], %s231
        %s233 = smul.u32 8, %s22
        %s234 = smul.u32 8, %s22
        %v236 = vld [vmem:[%s202] sm:$0xff]
        %v237 = vld [vmem:[%s202 + $0x8] sm:$0xff]
        %v238 = vld [vmem:[%s202 + $0x10] sm:$0xff]
        %v239 = vld [vmem:[%s202 + $0x18] sm:$0xff]
        %v240 = vld [vmem:[%s202 + $0x20] sm:$0xff]
        %v241 = vld [vmem:[%s202 + $0x28] sm:$0xff]
        %v242 = vld [vmem:[%s202 + $0x30] sm:$0xff]
        %v243 = vld [vmem:[%s202 + $0x38] sm:$0xff]
        %v244 = vmax.f32 %v236, 0.0
        %v245 = vmax.f32 %v237, 0.0
        %v246 = vmax.f32 %v238, 0.0
        %v247 = vmax.f32 %v239, 0.0
        %v248 = vmax.f32 %v240, 0.0
        %v249 = vmax.f32 %v241, 0.0
        %v250 = vmax.f32 %v242, 0.0
        %v251 = vmax.f32 %v243, 0.0
        %v252 = vld [vmem:[%s1] sm:$0xf]
        %253 = vrot.lane.b32.xlu0 %v244, 17
        %v254 = vpop.permute.xlu0 %253
        %255 = vrot.lane.b32.xlu0 %v245, 17
        %v256 = vpop.permute.xlu0 %255
        %257 = vrot.lane.b32.xlu0 %v246, 17
        %v258 = vpop.permute.xlu0 %257
        %259 = vrot.lane.b32.xlu0 %v247, 17
        %v260 = vpop.permute.xlu0 %259
        %261 = vrot.lane.b32.xlu0 %v248, 17
        %v262 = vpop.permute.xlu0 %261
        %263 = vrot.lane.b32.xlu0 %v249, 17
        %v264 = vpop.permute.xlu0 %263
        %265 = vrot.lane.b32.xlu0 %v250, 17
        %v266 = vpop.permute.xlu0 %265
        %267 = vrot.lane.b32.xlu0 %v251, 17
        %v268 = vpop.permute.xlu0 %267
        %v269 = vlaneseq
        %v270 = vand.u32 %v269, 127
        %vm271 = vcmp.lt.s32.totalorder %v270, 17
        %v272 = vsel %vm271, %v266, %v268
        %v273 = vsel %vm271, %v264, %v266
        %v274 = vsel %vm271, %v262, %v264
        %v275 = vsel %vm271, %v260, %v262
        %v276 = vsel %vm271, %v258, %v260
        %v277 = vsel %vm271, %v256, %v258
        %v278 = vsel %vm271, %v254, %v256
        %v279 = vsel %vm271, %v268, %v254
        %v280 = vld [vmem:[#allocation5] ss:$8 sm:$0xf]
        %v281 = vld [vmem:[#allocation5] ss:$8 sm:$0xf0]
        %v282 = vor.u32 %v280, %v281
        %v284 = vperm.slane %v282, 0
        %v285 = vperm.slane %v282, 1
        %v286 = vperm.slane %v282, 2
        %v287 = vperm.slane %v282, 3
        %v288 = vperm.slane %v282, 4
        %v289 = vperm.slane %v282, 5
        %v290 = vperm.slane %v282, 6
        %v291 = vperm.slane %v282, 7
        %v300 = vmul.f32 %v279, %v284
        %v301 = vmul.f32 %v278, %v285
        %v302 = vmul.f32 %v277, %v286
        %v303 = vmul.f32 %v276, %v287
        %v304 = vmul.f32 %v275, %v288
        %v305 = vmul.f32 %v274, %v289
        %v306 = vmul.f32 %v273, %v290
        %v307 = vmul.f32 %v272, %v291
        %v308 = vpack.c.bf16 %v300, %v300
        %v309 = vpack.c.bf16 %v301, %v301
        %v310 = vpack.c.bf16 %v302, %v302
        %v311 = vpack.c.bf16 %v303, %v303
        %v312 = vpack.c.bf16 %v304, %v304
        %v313 = vpack.c.bf16 %v305, %v305
        %v314 = vpack.c.bf16 %v306, %v306
        %v315 = vpack.c.bf16 %v307, %v307
        %s316 = scalar_lea.vmem %s1, 4
        %v317 = vld [vmem:[%s316] sm:$0xf]
        %318 = vrot.lane.b32.xlu0 %v244, 16
        %v319 = vpop.permute.xlu0 %318
        %320 = vrot.lane.b32.xlu0 %v245, 16
        %v321 = vpop.permute.xlu0 %320
        %322 = vrot.lane.b32.xlu0 %v246, 16
        %v323 = vpop.permute.xlu0 %322
        %324 = vrot.lane.b32.xlu0 %v247, 16
        %v325 = vpop.permute.xlu0 %324
        %326 = vrot.lane.b32.xlu0 %v248, 16
        %v327 = vpop.permute.xlu0 %326
        %328 = vrot.lane.b32.xlu0 %v249, 16
        %v329 = vpop.permute.xlu0 %328
        %330 = vrot.lane.b32.xlu0 %v250, 16
        %v331 = vpop.permute.xlu0 %330
        %332 = vrot.lane.b32.xlu0 %v251, 16
        %v333 = vpop.permute.xlu0 %332
        %vm334 = vcmp.lt.s32.totalorder %v270, 16
        %v335 = vsel %vm334, %v331, %v333
        %v336 = vsel %vm334, %v329, %v331
        %v337 = vsel %vm334, %v327, %v329
        %v338 = vsel %vm334, %v325, %v327
        %v339 = vsel %vm334, %v323, %v325
        %v340 = vsel %vm334, %v321, %v323
        %v341 = vsel %vm334, %v319, %v321
        %v342 = vsel %vm334, %v333, %v319
        %s343 = scalar_lea.vmem [#allocation5], 1
        %v344 = vld [vmem:[%s343] ss:$8 sm:$0xf]
        %v345 = vld [vmem:[%s343] ss:$8 sm:$0xf0]
        %v346 = vor.u32 %v344, %v345
        %v348 = vperm.slane %v346, 0
        %v349 = vperm.slane %v346, 1
        %v350 = vperm.slane %v346, 2
        %v351 = vperm.slane %v346, 3
        %v352 = vperm.slane %v346, 4
        %v353 = vperm.slane %v346, 5
        %v354 = vperm.slane %v346, 6
        %v355 = vperm.slane %v346, 7
        %v364 = vmul.f32 %v342, %v348
        %v365 = vmul.f32 %v341, %v349
        %v366 = vmul.f32 %v340, %v350
        %v367 = vmul.f32 %v339, %v351
        %v368 = vmul.f32 %v338, %v352
        %v369 = vmul.f32 %v337, %v353
        %v370 = vmul.f32 %v336, %v354
        %v371 = vmul.f32 %v335, %v355
        %v372 = vpack.c.bf16 %v364, %v364
        %v373 = vpack.c.bf16 %v365, %v365
        %v374 = vpack.c.bf16 %v366, %v366
        %v375 = vpack.c.bf16 %v367, %v367
        %v376 = vpack.c.bf16 %v368, %v368
        %v377 = vpack.c.bf16 %v369, %v369
        %v378 = vpack.c.bf16 %v370, %v370
        %v379 = vpack.c.bf16 %v371, %v371
        %vm380 = vcmask 64512
        %v382 = vsel %vm380, %v317, 0
        %vm384 = vcmask 1043456
        %v386 = vsel %vm384, %v372, 0
        %v389 = vsel %vm384, %v373, 0
        %v392 = vsel %vm384, %v374, 0
        %v395 = vsel %vm384, %v375, 0
        %v398 = vsel %vm384, %v376, 0
        %v401 = vsel %vm384, %v377, 0
        %v404 = vsel %vm384, %v378, 0
        %v407 = vsel %vm384, %v379, 0
        %409 = vmatpush.bf16.msra.mxu0 0
        %410 = vmatpush.bf16.msra.mxu0 0
        %411 = vmatpush.bf16.msra.mxu0 0
        %412 = vmatpush.bf16.msra.mxu0 0
        %413 = vmatpush.bf16.msra.mxu0 0
        %414 = vmatpush.bf16.msra.mxu0 0
        %415 = vmatpush.bf16.msra.mxu0 0
        %416 = vmatpush.bf16.msra.mxu0 %v386
        %417 = vmatmul.bf16.gmra.mxu0 %v382
        %v418 = vpop.f32.mrf.mxu0
        %v419 = vadd.f32 0.0, %v418
        %v420 = vpop.f32.mrf.mxu0
        %421 = vdwg.mxu0
        %422 = vmatpush.bf16.msra.mxu0 0
        %423 = vmatpush.bf16.msra.mxu0 0
        %424 = vmatpush.bf16.msra.mxu0 0
        %425 = vmatpush.bf16.msra.mxu0 0
        %426 = vmatpush.bf16.msra.mxu0 0
        %427 = vmatpush.bf16.msra.mxu0 0
        %428 = vmatpush.bf16.msra.mxu0 0
        %429 = vmatpush.bf16.msra.mxu0 %v389
        %430 = vmatmul.bf16.gmra.mxu0 %v382
        %v431 = vpop.f32.mrf.mxu0
        %v432 = vadd.f32 0.0, %v431
        %v433 = vpop.f32.mrf.mxu0
        %434 = vdwg.mxu0
        %435 = vmatpush.bf16.msra.mxu0 0
        %436 = vmatpush.bf16.msra.mxu0 0
        %437 = vmatpush.bf16.msra.mxu0 0
        %438 = vmatpush.bf16.msra.mxu0 0
        %439 = vmatpush.bf16.msra.mxu0 0
        %440 = vmatpush.bf16.msra.mxu0 0
        %441 = vmatpush.bf16.msra.mxu0 0
        %442 = vmatpush.bf16.msra.mxu0 %v392
        %443 = vmatmul.bf16.gmra.mxu0 %v382
        %v444 = vpop.f32.mrf.mxu0
        %v445 = vadd.f32 0.0, %v444
        %v446 = vpop.f32.mrf.mxu0
        %447 = vdwg.mxu0
        %448 = vmatpush.bf16.msra.mxu0 0
        %449 = vmatpush.bf16.msra.mxu0 0
        %450 = vmatpush.bf16.msra.mxu0 0
        %451 = vmatpush.bf16.msra.mxu0 0
        %452 = vmatpush.bf16.msra.mxu0 0
        %453 = vmatpush.bf16.msra.mxu0 0
        %454 = vmatpush.bf16.msra.mxu0 0
        %455 = vmatpush.bf16.msra.mxu0 %v395
        %456 = vmatmul.bf16.gmra.mxu0 %v382
        %v457 = vpop.f32.mrf.mxu0
        %v458 = vadd.f32 0.0, %v457
        %v459 = vpop.f32.mrf.mxu0
        %460 = vdwg.mxu0
        %461 = vmatpush.bf16.msra.mxu0 0
        %462 = vmatpush.bf16.msra.mxu0 0
        %463 = vmatpush.bf16.msra.mxu0 0
        %464 = vmatpush.bf16.msra.mxu0 0
        %465 = vmatpush.bf16.msra.mxu0 0
        %466 = vmatpush.bf16.msra.mxu0 0
        %467 = vmatpush.bf16.msra.mxu0 0
        %468 = vmatpush.bf16.msra.mxu0 %v398
        %469 = vmatmul.bf16.gmra.mxu0 %v382
        %v470 = vpop.f32.mrf.mxu0
        %v471 = vadd.f32 0.0, %v470
        %v472 = vpop.f32.mrf.mxu0
        %473 = vdwg.mxu0
        %474 = vmatpush.bf16.msra.mxu0 0
        %475 = vmatpush.bf16.msra.mxu0 0
        %476 = vmatpush.bf16.msra.mxu0 0
        %477 = vmatpush.bf16.msra.mxu0 0
        %478 = vmatpush.bf16.msra.mxu0 0
        %479 = vmatpush.bf16.msra.mxu0 0
        %480 = vmatpush.bf16.msra.mxu0 0
        %481 = vmatpush.bf16.msra.mxu0 %v401
        %482 = vmatmul.bf16.gmra.mxu0 %v382
        %v483 = vpop.f32.mrf.mxu0
        %v484 = vadd.f32 0.0, %v483
        %v485 = vpop.f32.mrf.mxu0
        %486 = vdwg.mxu0
        %487 = vmatpush.bf16.msra.mxu0 0
        %488 = vmatpush.bf16.msra.mxu0 0
        %489 = vmatpush.bf16.msra.mxu0 0
        %490 = vmatpush.bf16.msra.mxu0 0
        %491 = vmatpush.bf16.msra.mxu0 0
        %492 = vmatpush.bf16.msra.mxu0 0
        %493 = vmatpush.bf16.msra.mxu0 0
        %494 = vmatpush.bf16.msra.mxu0 %v404
        %495 = vmatmul.bf16.gmra.mxu0 %v382
        %v496 = vpop.f32.mrf.mxu0
        %v497 = vadd.f32 0.0, %v496
        %v498 = vpop.f32.mrf.mxu0
        %499 = vdwg.mxu0
        %500 = vmatpush.bf16.msra.mxu0 0
        %501 = vmatpush.bf16.msra.mxu0 0
        %502 = vmatpush.bf16.msra.mxu0 0
        %503 = vmatpush.bf16.msra.mxu0 0
        %504 = vmatpush.bf16.msra.mxu0 0
        %505 = vmatpush.bf16.msra.mxu0 0
        %506 = vmatpush.bf16.msra.mxu0 0
        %507 = vmatpush.bf16.msra.mxu0 %v407
        %508 = vmatmul.bf16.gmra.mxu0 %v382
        %v509 = vpop.f32.mrf.mxu0
        %v510 = vadd.f32 0.0, %v509
        %v511 = vpop.f32.mrf.mxu0
        %512 = vdwg.mxu0
        %v514 = vsel %vm380, %v252, 0
        %v517 = vsel %vm384, %v308, 0
        %v520 = vsel %vm384, %v309, 0
        %v523 = vsel %vm384, %v310, 0
        %v526 = vsel %vm384, %v311, 0
        %v529 = vsel %vm384, %v312, 0
        %v532 = vsel %vm384, %v313, 0
        %v535 = vsel %vm384, %v314, 0
        %v538 = vsel %vm384, %v315, 0
        %540 = vmatpush.bf16.msra.mxu0 0
        %541 = vmatpush.bf16.msra.mxu0 0
        %542 = vmatpush.bf16.msra.mxu0 0
        %543 = vmatpush.bf16.msra.mxu0 0
        %544 = vmatpush.bf16.msra.mxu0 0
        %545 = vmatpush.bf16.msra.mxu0 0
        %546 = vmatpush.bf16.msra.mxu0 0
        %547 = vmatpush.bf16.msra.mxu0 %v517
        %548 = vmatmul.bf16.gmra.mxu0 %v514
        %v549 = vpop.f32.mrf.mxu0
        %v550 = vadd.f32 %v419, %v549
        %v551 = vpop.f32.mrf.mxu0
        %552 = vdwg.mxu0
        %553 = vmatpush.bf16.msra.mxu0 0
        %554 = vmatpush.bf16.msra.mxu0 0
        %555 = vmatpush.bf16.msra.mxu0 0
        %556 = vmatpush.bf16.msra.mxu0 0
        %557 = vmatpush.bf16.msra.mxu0 0
        %558 = vmatpush.bf16.msra.mxu0 0
        %559 = vmatpush.bf16.msra.mxu0 0
        %560 = vmatpush.bf16.msra.mxu0 %v520
        %561 = vmatmul.bf16.gmra.mxu0 %v514
        %v562 = vpop.f32.mrf.mxu0
        %v563 = vadd.f32 %v432, %v562
        %v564 = vpop.f32.mrf.mxu0
        %565 = vdwg.mxu0
        %566 = vmatpush.bf16.msra.mxu0 0
        %567 = vmatpush.bf16.msra.mxu0 0
        %568 = vmatpush.bf16.msra.mxu0 0
        %569 = vmatpush.bf16.msra.mxu0 0
        %570 = vmatpush.bf16.msra.mxu0 0
        %571 = vmatpush.bf16.msra.mxu0 0
        %572 = vmatpush.bf16.msra.mxu0 0
        %573 = vmatpush.bf16.msra.mxu0 %v523
        %574 = vmatmul.bf16.gmra.mxu0 %v514
        %v575 = vpop.f32.mrf.mxu0
        %v576 = vadd.f32 %v445, %v575
        %v577 = vpop.f32.mrf.mxu0
        %578 = vdwg.mxu0
        %579 = vmatpush.bf16.msra.mxu0 0
        %580 = vmatpush.bf16.msra.mxu0 0
        %581 = vmatpush.bf16.msra.mxu0 0
        %582 = vmatpush.bf16.msra.mxu0 0
        %583 = vmatpush.bf16.msra.mxu0 0
        %584 = vmatpush.bf16.msra.mxu0 0
        %585 = vmatpush.bf16.msra.mxu0 0
        %586 = vmatpush.bf16.msra.mxu0 %v526
        %587 = vmatmul.bf16.gmra.mxu0 %v514
        %v588 = vpop.f32.mrf.mxu0
        %v589 = vadd.f32 %v458, %v588
        %v590 = vpop.f32.mrf.mxu0
        %591 = vdwg.mxu0
        %592 = vmatpush.bf16.msra.mxu0 0
        %593 = vmatpush.bf16.msra.mxu0 0
        %594 = vmatpush.bf16.msra.mxu0 0
        %595 = vmatpush.bf16.msra.mxu0 0
        %596 = vmatpush.bf16.msra.mxu0 0
        %597 = vmatpush.bf16.msra.mxu0 0
        %598 = vmatpush.bf16.msra.mxu0 0
        %599 = vmatpush.bf16.msra.mxu0 %v529
        %600 = vmatmul.bf16.gmra.mxu0 %v514
        %v601 = vpop.f32.mrf.mxu0
        %v602 = vadd.f32 %v471, %v601
        %v603 = vpop.f32.mrf.mxu0
        %604 = vdwg.mxu0
        %605 = vmatpush.bf16.msra.mxu0 0
        %606 = vmatpush.bf16.msra.mxu0 0
        %607 = vmatpush.bf16.msra.mxu0 0
        %608 = vmatpush.bf16.msra.mxu0 0
        %609 = vmatpush.bf16.msra.mxu0 0
        %610 = vmatpush.bf16.msra.mxu0 0
        %611 = vmatpush.bf16.msra.mxu0 0
        %612 = vmatpush.bf16.msra.mxu0 %v532
        %613 = vmatmul.bf16.gmra.mxu0 %v514
        %v614 = vpop.f32.mrf.mxu0
        %v615 = vadd.f32 %v484, %v614
        %v616 = vpop.f32.mrf.mxu0
        %617 = vdwg.mxu0
        %618 = vmatpush.bf16.msra.mxu0 0
        %619 = vmatpush.bf16.msra.mxu0 0
        %620 = vmatpush.bf16.msra.mxu0 0
        %621 = vmatpush.bf16.msra.mxu0 0
        %622 = vmatpush.bf16.msra.mxu0 0
        %623 = vmatpush.bf16.msra.mxu0 0
        %624 = vmatpush.bf16.msra.mxu0 0
        %625 = vmatpush.bf16.msra.mxu0 %v535
        %626 = vmatmul.bf16.gmra.mxu0 %v514
        %v627 = vpop.f32.mrf.mxu0
        %v628 = vadd.f32 %v497, %v627
        %v629 = vpop.f32.mrf.mxu0
        %630 = vdwg.mxu0
        %631 = vmatpush.bf16.msra.mxu0 0
        %632 = vmatpush.bf16.msra.mxu0 0
        %633 = vmatpush.bf16.msra.mxu0 0
        %634 = vmatpush.bf16.msra.mxu0 0
        %635 = vmatpush.bf16.msra.mxu0 0
        %636 = vmatpush.bf16.msra.mxu0 0
        %637 = vmatpush.bf16.msra.mxu0 0
        %638 = vmatpush.bf16.msra.mxu0 %v538
        %639 = vmatmul.bf16.gmra.mxu0 %v514
        %v640 = vpop.f32.mrf.mxu0
        %v641 = vadd.f32 %v510, %v640
        %v642 = vpop.f32.mrf.mxu0
        %643 = vdwg.mxu0
        %s644 = scalar_lea.vmem %s1, 8
        %v645 = vld [vmem:[%s644] sm:$0xf]
        %646 = vrot.lane.b32.xlu0 %v244, 15
        %v647 = vpop.permute.xlu0 %646
        %648 = vrot.lane.b32.xlu0 %v245, 15
        %v649 = vpop.permute.xlu0 %648
        %650 = vrot.lane.b32.xlu0 %v246, 15
        %v651 = vpop.permute.xlu0 %650
        %652 = vrot.lane.b32.xlu0 %v247, 15
        %v653 = vpop.permute.xlu0 %652
        %654 = vrot.lane.b32.xlu0 %v248, 15
        %v655 = vpop.permute.xlu0 %654
        %656 = vrot.lane.b32.xlu0 %v249, 15
        %v657 = vpop.permute.xlu0 %656
        %658 = vrot.lane.b32.xlu0 %v250, 15
        %v659 = vpop.permute.xlu0 %658
        %660 = vrot.lane.b32.xlu0 %v251, 15
        %v661 = vpop.permute.xlu0 %660
        %vm662 = vcmp.lt.s32.totalorder %v270, 15
        %v663 = vsel %vm662, %v659, %v661
        %v664 = vsel %vm662, %v657, %v659
        %v665 = vsel %vm662, %v655, %v657
        %v666 = vsel %vm662, %v653, %v655
        %v667 = vsel %vm662, %v651, %v653
        %v668 = vsel %vm662, %v649, %v651
        %v669 = vsel %vm662, %v647, %v649
        %v670 = vsel %vm662, %v661, %v647
        %s671 = scalar_lea.vmem [#allocation5], 2
        %v672 = vld [vmem:[%s671] ss:$8 sm:$0xf]
        %v673 = vld [vmem:[%s671] ss:$8 sm:$0xf0]
        %v674 = vor.u32 %v672, %v673
        %v676 = vperm.slane %v674, 0
        %v677 = vperm.slane %v674, 1
        %v678 = vperm.slane %v674, 2
        %v679 = vperm.slane %v674, 3
        %v680 = vperm.slane %v674, 4
        %v681 = vperm.slane %v674, 5
        %v682 = vperm.slane %v674, 6
        %v683 = vperm.slane %v674, 7
        %v692 = vmul.f32 %v670, %v676
        %v693 = vmul.f32 %v669, %v677
        %v694 = vmul.f32 %v668, %v678
        %v695 = vmul.f32 %v667, %v679
        %v696 = vmul.f32 %v666, %v680
        %v697 = vmul.f32 %v665, %v681
        %v698 = vmul.f32 %v664, %v682
        %v699 = vmul.f32 %v663, %v683
        %v700 = vpack.c.bf16 %v692, %v692
        %v701 = vpack.c.bf16 %v693, %v693
        %v702 = vpack.c.bf16 %v694, %v694
        %v703 = vpack.c.bf16 %v695, %v695
        %v704 = vpack.c.bf16 %v696, %v696
        %v705 = vpack.c.bf16 %v697, %v697
        %v706 = vpack.c.bf16 %v698, %v698
        %v707 = vpack.c.bf16 %v699, %v699
        %v709 = vsel %vm380, %v645, 0
        %v712 = vsel %vm384, %v700, 0
        %v715 = vsel %vm384, %v701, 0
        %v718 = vsel %vm384, %v702, 0
        %v721 = vsel %vm384, %v703, 0
        %v724 = vsel %vm384, %v704, 0
        %v727 = vsel %vm384, %v705, 0
        %v730 = vsel %vm384, %v706, 0
        %v733 = vsel %vm384, %v707, 0
        %735 = vmatpush.bf16.msra.mxu0 0
        %736 = vmatpush.bf16.msra.mxu0 0
        %737 = vmatpush.bf16.msra.mxu0 0
        %738 = vmatpush.bf16.msra.mxu0 0
        %739 = vmatpush.bf16.msra.mxu0 0
        %740 = vmatpush.bf16.msra.mxu0 0
        %741 = vmatpush.bf16.msra.mxu0 0
        %742 = vmatpush.bf16.msra.mxu0 %v712
        %743 = vmatmul.bf16.gmra.mxu0 %v709
        %v744 = vpop.f32.mrf.mxu0
        %v745 = vadd.f32 0.0, %v744
        %v746 = vpop.f32.mrf.mxu0
        %747 = vdwg.mxu0
        %748 = vmatpush.bf16.msra.mxu0 0
        %749 = vmatpush.bf16.msra.mxu0 0
        %750 = vmatpush.bf16.msra.mxu0 0
        %751 = vmatpush.bf16.msra.mxu0 0
        %752 = vmatpush.bf16.msra.mxu0 0
        %753 = vmatpush.bf16.msra.mxu0 0
        %754 = vmatpush.bf16.msra.mxu0 0
        %755 = vmatpush.bf16.msra.mxu0 %v715
        %756 = vmatmul.bf16.gmra.mxu0 %v709
        %v757 = vpop.f32.mrf.mxu0
        %v758 = vadd.f32 0.0, %v757
        %v759 = vpop.f32.mrf.mxu0
        %760 = vdwg.mxu0
        %761 = vmatpush.bf16.msra.mxu0 0
        %762 = vmatpush.bf16.msra.mxu0 0
        %763 = vmatpush.bf16.msra.mxu0 0
        %764 = vmatpush.bf16.msra.mxu0 0
        %765 = vmatpush.bf16.msra.mxu0 0
        %766 = vmatpush.bf16.msra.mxu0 0
        %767 = vmatpush.bf16.msra.mxu0 0
        %768 = vmatpush.bf16.msra.mxu0 %v718
        %769 = vmatmul.bf16.gmra.mxu0 %v709
        %v770 = vpop.f32.mrf.mxu0
        %v771 = vadd.f32 0.0, %v770
        %v772 = vpop.f32.mrf.mxu0
        %773 = vdwg.mxu0
        %774 = vmatpush.bf16.msra.mxu0 0
        %775 = vmatpush.bf16.msra.mxu0 0
        %776 = vmatpush.bf16.msra.mxu0 0
        %777 = vmatpush.bf16.msra.mxu0 0
        %778 = vmatpush.bf16.msra.mxu0 0
        %779 = vmatpush.bf16.msra.mxu0 0
        %780 = vmatpush.bf16.msra.mxu0 0
        %781 = vmatpush.bf16.msra.mxu0 %v721
        %782 = vmatmul.bf16.gmra.mxu0 %v709
        %v783 = vpop.f32.mrf.mxu0
        %v784 = vadd.f32 0.0, %v783
        %v785 = vpop.f32.mrf.mxu0
        %786 = vdwg.mxu0
        %787 = vmatpush.bf16.msra.mxu0 0
        %788 = vmatpush.bf16.msra.mxu0 0
        %789 = vmatpush.bf16.msra.mxu0 0
        %790 = vmatpush.bf16.msra.mxu0 0
        %791 = vmatpush.bf16.msra.mxu0 0
        %792 = vmatpush.bf16.msra.mxu0 0
        %793 = vmatpush.bf16.msra.mxu0 0
        %794 = vmatpush.bf16.msra.mxu0 %v724
        %795 = vmatmul.bf16.gmra.mxu0 %v709
        %v796 = vpop.f32.mrf.mxu0
        %v797 = vadd.f32 0.0, %v796
        %v798 = vpop.f32.mrf.mxu0
        %799 = vdwg.mxu0
        %800 = vmatpush.bf16.msra.mxu0 0
        %801 = vmatpush.bf16.msra.mxu0 0
        %802 = vmatpush.bf16.msra.mxu0 0
        %803 = vmatpush.bf16.msra.mxu0 0
        %804 = vmatpush.bf16.msra.mxu0 0
        %805 = vmatpush.bf16.msra.mxu0 0
        %806 = vmatpush.bf16.msra.mxu0 0
        %807 = vmatpush.bf16.msra.mxu0 %v727
        %808 = vmatmul.bf16.gmra.mxu0 %v709
        %v809 = vpop.f32.mrf.mxu0
        %v810 = vadd.f32 0.0, %v809
        %v811 = vpop.f32.mrf.mxu0
        %812 = vdwg.mxu0
        %813 = vmatpush.bf16.msra.mxu0 0
        %814 = vmatpush.bf16.msra.mxu0 0
        %815 = vmatpush.bf16.msra.mxu0 0
        %816 = vmatpush.bf16.msra.mxu0 0
        %817 = vmatpush.bf16.msra.mxu0 0
        %818 = vmatpush.bf16.msra.mxu0 0
        %819 = vmatpush.bf16.msra.mxu0 0
        %820 = vmatpush.bf16.msra.mxu0 %v730
        %821 = vmatmul.bf16.gmra.mxu0 %v709
        %v822 = vpop.f32.mrf.mxu0
        %v823 = vadd.f32 0.0, %v822
        %v824 = vpop.f32.mrf.mxu0
        %825 = vdwg.mxu0
        %826 = vmatpush.bf16.msra.mxu0 0
        %827 = vmatpush.bf16.msra.mxu0 0
        %828 = vmatpush.bf16.msra.mxu0 0
        %829 = vmatpush.bf16.msra.mxu0 0
        %830 = vmatpush.bf16.msra.mxu0 0
        %831 = vmatpush.bf16.msra.mxu0 0
        %832 = vmatpush.bf16.msra.mxu0 0
        %833 = vmatpush.bf16.msra.mxu0 %v733
        %834 = vmatmul.bf16.gmra.mxu0 %v709
        %v835 = vpop.f32.mrf.mxu0
        %v836 = vadd.f32 0.0, %v835
        %v837 = vpop.f32.mrf.mxu0
        %838 = vdwg.mxu0
        %v839 = vadd.f32 %v550, %v745
        %v840 = vadd.f32 %v563, %v758
        %v841 = vadd.f32 %v576, %v771
        %v842 = vadd.f32 %v589, %v784
        %v843 = vadd.f32 %v602, %v797
        %v844 = vadd.f32 %v615, %v810
        %v845 = vadd.f32 %v628, %v823
        %v846 = vadd.f32 %v641, %v836
        %s847 = scalar_lea.vmem %s1, 12
        %v848 = vld [vmem:[%s847] sm:$0xf]
        %849 = vrot.lane.b32.xlu0 %v244, 1
        %v850 = vpop.permute.xlu0 %849
        %851 = vrot.lane.b32.xlu0 %v245, 1
        %v852 = vpop.permute.xlu0 %851
        %853 = vrot.lane.b32.xlu0 %v246, 1
        %v854 = vpop.permute.xlu0 %853
        %855 = vrot.lane.b32.xlu0 %v247, 1
        %v856 = vpop.permute.xlu0 %855
        %857 = vrot.lane.b32.xlu0 %v248, 1
        %v858 = vpop.permute.xlu0 %857
        %859 = vrot.lane.b32.xlu0 %v249, 1
        %v860 = vpop.permute.xlu0 %859
        %861 = vrot.lane.b32.xlu0 %v250, 1
        %v862 = vpop.permute.xlu0 %861
        %863 = vrot.lane.b32.xlu0 %v251, 1
        %v864 = vpop.permute.xlu0 %863
        %vm865 = vcmp.lt.s32.totalorder %v270, 1
        %v866 = vsel %vm865, %v862, %v864
        %v867 = vsel %vm865, %v860, %v862
        %v868 = vsel %vm865, %v858, %v860
        %v869 = vsel %vm865, %v856, %v858
        %v870 = vsel %vm865, %v854, %v856
        %v871 = vsel %vm865, %v852, %v854
        %v872 = vsel %vm865, %v850, %v852
        %v873 = vsel %vm865, %v864, %v850
        %s874 = scalar_lea.vmem [#allocation5], 3
        %v875 = vld [vmem:[%s874] ss:$8 sm:$0xf]
        %v876 = vld [vmem:[%s874] ss:$8 sm:$0xf0]
        %v877 = vor.u32 %v875, %v876
        %v879 = vperm.slane %v877, 0
        %v880 = vperm.slane %v877, 1
        %v881 = vperm.slane %v877, 2
        %v882 = vperm.slane %v877, 3
        %v883 = vperm.slane %v877, 4
        %v884 = vperm.slane %v877, 5
        %v885 = vperm.slane %v877, 6
        %v886 = vperm.slane %v877, 7
        %v895 = vmul.f32 %v873, %v879
        %v896 = vmul.f32 %v872, %v880
        %v897 = vmul.f32 %v871, %v881
        %v898 = vmul.f32 %v870, %v882
        %v899 = vmul.f32 %v869, %v883
        %v900 = vmul.f32 %v868, %v884
        %v901 = vmul.f32 %v867, %v885
        %v902 = vmul.f32 %v866, %v886
        %v903 = vpack.c.bf16 %v895, %v895
        %v904 = vpack.c.bf16 %v896, %v896
        %v905 = vpack.c.bf16 %v897, %v897
        %v906 = vpack.c.bf16 %v898, %v898
        %v907 = vpack.c.bf16 %v899, %v899
        %v908 = vpack.c.bf16 %v900, %v900
        %v909 = vpack.c.bf16 %v901, %v901
        %v910 = vpack.c.bf16 %v902, %v902
        %v912 = vsel %vm380, %v848, 0
        %v915 = vsel %vm384, %v903, 0
        %v918 = vsel %vm384, %v904, 0
        %v921 = vsel %vm384, %v905, 0
        %v924 = vsel %vm384, %v906, 0
        %v927 = vsel %vm384, %v907, 0
        %v930 = vsel %vm384, %v908, 0
        %v933 = vsel %vm384, %v909, 0
        %v936 = vsel %vm384, %v910, 0
        %938 = vmatpush.bf16.msra.mxu0 0
        %939 = vmatpush.bf16.msra.mxu0 0
        %940 = vmatpush.bf16.msra.mxu0 0
        %941 = vmatpush.bf16.msra.mxu0 0
        %942 = vmatpush.bf16.msra.mxu0 0
        %943 = vmatpush.bf16.msra.mxu0 0
        %944 = vmatpush.bf16.msra.mxu0 0
        %945 = vmatpush.bf16.msra.mxu0 %v915
        %946 = vmatmul.bf16.gmra.mxu0 %v912
        %v947 = vpop.f32.mrf.mxu0
        %v948 = vadd.f32 0.0, %v947
        %v949 = vpop.f32.mrf.mxu0
        %950 = vdwg.mxu0
        %951 = vmatpush.bf16.msra.mxu0 0
        %952 = vmatpush.bf16.msra.mxu0 0
        %953 = vmatpush.bf16.msra.mxu0 0
        %954 = vmatpush.bf16.msra.mxu0 0
        %955 = vmatpush.bf16.msra.mxu0 0
        %956 = vmatpush.bf16.msra.mxu0 0
        %957 = vmatpush.bf16.msra.mxu0 0
        %958 = vmatpush.bf16.msra.mxu0 %v918
        %959 = vmatmul.bf16.gmra.mxu0 %v912
        %v960 = vpop.f32.mrf.mxu0
        %v961 = vadd.f32 0.0, %v960
        %v962 = vpop.f32.mrf.mxu0
        %963 = vdwg.mxu0
        %964 = vmatpush.bf16.msra.mxu0 0
        %965 = vmatpush.bf16.msra.mxu0 0
        %966 = vmatpush.bf16.msra.mxu0 0
        %967 = vmatpush.bf16.msra.mxu0 0
        %968 = vmatpush.bf16.msra.mxu0 0
        %969 = vmatpush.bf16.msra.mxu0 0
        %970 = vmatpush.bf16.msra.mxu0 0
        %971 = vmatpush.bf16.msra.mxu0 %v921
        %972 = vmatmul.bf16.gmra.mxu0 %v912
        %v973 = vpop.f32.mrf.mxu0
        %v974 = vadd.f32 0.0, %v973
        %v975 = vpop.f32.mrf.mxu0
        %976 = vdwg.mxu0
        %977 = vmatpush.bf16.msra.mxu0 0
        %978 = vmatpush.bf16.msra.mxu0 0
        %979 = vmatpush.bf16.msra.mxu0 0
        %980 = vmatpush.bf16.msra.mxu0 0
        %981 = vmatpush.bf16.msra.mxu0 0
        %982 = vmatpush.bf16.msra.mxu0 0
        %983 = vmatpush.bf16.msra.mxu0 0
        %984 = vmatpush.bf16.msra.mxu0 %v924
        %985 = vmatmul.bf16.gmra.mxu0 %v912
        %v986 = vpop.f32.mrf.mxu0
        %v987 = vadd.f32 0.0, %v986
        %v988 = vpop.f32.mrf.mxu0
        %989 = vdwg.mxu0
        %990 = vmatpush.bf16.msra.mxu0 0
        %991 = vmatpush.bf16.msra.mxu0 0
        %992 = vmatpush.bf16.msra.mxu0 0
        %993 = vmatpush.bf16.msra.mxu0 0
        %994 = vmatpush.bf16.msra.mxu0 0
        %995 = vmatpush.bf16.msra.mxu0 0
        %996 = vmatpush.bf16.msra.mxu0 0
        %997 = vmatpush.bf16.msra.mxu0 %v927
        %998 = vmatmul.bf16.gmra.mxu0 %v912
        %v999 = vpop.f32.mrf.mxu0
        %v1000 = vadd.f32 0.0, %v999
        %v1001 = vpop.f32.mrf.mxu0
        %1002 = vdwg.mxu0
        %1003 = vmatpush.bf16.msra.mxu0 0
        %1004 = vmatpush.bf16.msra.mxu0 0
        %1005 = vmatpush.bf16.msra.mxu0 0
        %1006 = vmatpush.bf16.msra.mxu0 0
        %1007 = vmatpush.bf16.msra.mxu0 0
        %1008 = vmatpush.bf16.msra.mxu0 0
        %1009 = vmatpush.bf16.msra.mxu0 0
        %1010 = vmatpush.bf16.msra.mxu0 %v930
        %1011 = vmatmul.bf16.gmra.mxu0 %v912
        %v1012 = vpop.f32.mrf.mxu0
        %v1013 = vadd.f32 0.0, %v1012
        %v1014 = vpop.f32.mrf.mxu0
        %1015 = vdwg.mxu0
        %1016 = vmatpush.bf16.msra.mxu0 0
        %1017 = vmatpush.bf16.msra.mxu0 0
        %1018 = vmatpush.bf16.msra.mxu0 0
        %1019 = vmatpush.bf16.msra.mxu0 0
        %1020 = vmatpush.bf16.msra.mxu0 0
        %1021 = vmatpush.bf16.msra.mxu0 0
        %1022 = vmatpush.bf16.msra.mxu0 0
        %1023 = vmatpush.bf16.msra.mxu0 %v933
        %1024 = vmatmul.bf16.gmra.mxu0 %v912
        %v1025 = vpop.f32.mrf.mxu0
        %v1026 = vadd.f32 0.0, %v1025
        %v1027 = vpop.f32.mrf.mxu0
        %1028 = vdwg.mxu0
        %1029 = vmatpush.bf16.msra.mxu0 0
        %1030 = vmatpush.bf16.msra.mxu0 0
        %1031 = vmatpush.bf16.msra.mxu0 0
        %1032 = vmatpush.bf16.msra.mxu0 0
        %1033 = vmatpush.bf16.msra.mxu0 0
        %1034 = vmatpush.bf16.msra.mxu0 0
        %1035 = vmatpush.bf16.msra.mxu0 0
        %1036 = vmatpush.bf16.msra.mxu0 %v936
        %1037 = vmatmul.bf16.gmra.mxu0 %v912
        %v1038 = vpop.f32.mrf.mxu0
        %v1039 = vadd.f32 0.0, %v1038
        %v1040 = vpop.f32.mrf.mxu0
        %1041 = vdwg.mxu0
        %v1042 = vadd.f32 %v839, %v948
        %v1043 = vadd.f32 %v840, %v961
        %v1044 = vadd.f32 %v841, %v974
        %v1045 = vadd.f32 %v842, %v987
        %v1046 = vadd.f32 %v843, %v1000
        %v1047 = vadd.f32 %v844, %v1013
        %v1048 = vadd.f32 %v845, %v1026
        %v1049 = vadd.f32 %v846, %v1039
        %s1050 = scalar_lea.vmem %s1, 16
        %v1051 = vld [vmem:[%s1050] sm:$0xf]
        %s1052 = scalar_lea.vmem [#allocation5], 4
        %v1053 = vld [vmem:[%s1052] ss:$8 sm:$0xf]
        %v1054 = vld [vmem:[%s1052] ss:$8 sm:$0xf0]
        %v1055 = vor.u32 %v1053, %v1054
        %v1057 = vperm.slane %v1055, 0
        %v1058 = vperm.slane %v1055, 1
        %v1059 = vperm.slane %v1055, 2
        %v1060 = vperm.slane %v1055, 3
        %v1061 = vperm.slane %v1055, 4
        %v1062 = vperm.slane %v1055, 5
        %v1063 = vperm.slane %v1055, 6
        %v1064 = vperm.slane %v1055, 7
        %v1073 = vmul.f32 %v244, %v1057
        %v1074 = vmul.f32 %v245, %v1058
        %v1075 = vmul.f32 %v246, %v1059
        %v1076 = vmul.f32 %v247, %v1060
        %v1077 = vmul.f32 %v248, %v1061
        %v1078 = vmul.f32 %v249, %v1062
        %v1079 = vmul.f32 %v250, %v1063
        %v1080 = vmul.f32 %v251, %v1064
        %v1081 = vpack.c.bf16 %v1073, %v1073
        %v1082 = vpack.c.bf16 %v1074, %v1074
        %v1083 = vpack.c.bf16 %v1075, %v1075
        %v1084 = vpack.c.bf16 %v1076, %v1076
        %v1085 = vpack.c.bf16 %v1077, %v1077
        %v1086 = vpack.c.bf16 %v1078, %v1078
        %v1087 = vpack.c.bf16 %v1079, %v1079
        %v1088 = vpack.c.bf16 %v1080, %v1080
        %v1090 = vsel %vm380, %v1051, 0
        %v1093 = vsel %vm384, %v1081, 0
        %v1096 = vsel %vm384, %v1082, 0
        %v1099 = vsel %vm384, %v1083, 0
        %v1102 = vsel %vm384, %v1084, 0
        %v1105 = vsel %vm384, %v1085, 0
        %v1108 = vsel %vm384, %v1086, 0
        %v1111 = vsel %vm384, %v1087, 0
        %v1114 = vsel %vm384, %v1088, 0
        %1116 = vmatpush.bf16.msra.mxu0 0
        %1117 = vmatpush.bf16.msra.mxu0 0
        %1118 = vmatpush.bf16.msra.mxu0 0
        %1119 = vmatpush.bf16.msra.mxu0 0
        %1120 = vmatpush.bf16.msra.mxu0 0
        %1121 = vmatpush.bf16.msra.mxu0 0
        %1122 = vmatpush.bf16.msra.mxu0 0
        %1123 = vmatpush.bf16.msra.mxu0 %v1093
        %1124 = vmatmul.bf16.gmra.mxu0 %v1090
        %v1125 = vpop.f32.mrf.mxu0
        %v1126 = vadd.f32 0.0, %v1125
        %v1127 = vpop.f32.mrf.mxu0
        %1128 = vdwg.mxu0
        %1129 = vmatpush.bf16.msra.mxu0 0
        %1130 = vmatpush.bf16.msra.mxu0 0
        %1131 = vmatpush.bf16.msra.mxu0 0
        %1132 = vmatpush.bf16.msra.mxu0 0
        %1133 = vmatpush.bf16.msra.mxu0 0
        %1134 = vmatpush.bf16.msra.mxu0 0
        %1135 = vmatpush.bf16.msra.mxu0 0
        %1136 = vmatpush.bf16.msra.mxu0 %v1096
        %1137 = vmatmul.bf16.gmra.mxu0 %v1090
        %v1138 = vpop.f32.mrf.mxu0
        %v1139 = vadd.f32 0.0, %v1138
        %v1140 = vpop.f32.mrf.mxu0
        %1141 = vdwg.mxu0
        %1142 = vmatpush.bf16.msra.mxu0 0
        %1143 = vmatpush.bf16.msra.mxu0 0
        %1144 = vmatpush.bf16.msra.mxu0 0
        %1145 = vmatpush.bf16.msra.mxu0 0
        %1146 = vmatpush.bf16.msra.mxu0 0
        %1147 = vmatpush.bf16.msra.mxu0 0
        %1148 = vmatpush.bf16.msra.mxu0 0
        %1149 = vmatpush.bf16.msra.mxu0 %v1099
        %1150 = vmatmul.bf16.gmra.mxu0 %v1090
        %v1151 = vpop.f32.mrf.mxu0
        %v1152 = vadd.f32 0.0, %v1151
        %v1153 = vpop.f32.mrf.mxu0
        %1154 = vdwg.mxu0
        %1155 = vmatpush.bf16.msra.mxu0 0
        %1156 = vmatpush.bf16.msra.mxu0 0
        %1157 = vmatpush.bf16.msra.mxu0 0
        %1158 = vmatpush.bf16.msra.mxu0 0
        %1159 = vmatpush.bf16.msra.mxu0 0
        %1160 = vmatpush.bf16.msra.mxu0 0
        %1161 = vmatpush.bf16.msra.mxu0 0
        %1162 = vmatpush.bf16.msra.mxu0 %v1102
        %1163 = vmatmul.bf16.gmra.mxu0 %v1090
        %v1164 = vpop.f32.mrf.mxu0
        %v1165 = vadd.f32 0.0, %v1164
        %v1166 = vpop.f32.mrf.mxu0
        %1167 = vdwg.mxu0
        %1168 = vmatpush.bf16.msra.mxu0 0
        %1169 = vmatpush.bf16.msra.mxu0 0
        %1170 = vmatpush.bf16.msra.mxu0 0
        %1171 = vmatpush.bf16.msra.mxu0 0
        %1172 = vmatpush.bf16.msra.mxu0 0
        %1173 = vmatpush.bf16.msra.mxu0 0
        %1174 = vmatpush.bf16.msra.mxu0 0
        %1175 = vmatpush.bf16.msra.mxu0 %v1105
        %1176 = vmatmul.bf16.gmra.mxu0 %v1090
        %v1177 = vpop.f32.mrf.mxu0
        %v1178 = vadd.f32 0.0, %v1177
        %v1179 = vpop.f32.mrf.mxu0
        %1180 = vdwg.mxu0
        %1181 = vmatpush.bf16.msra.mxu0 0
        %1182 = vmatpush.bf16.msra.mxu0 0
        %1183 = vmatpush.bf16.msra.mxu0 0
        %1184 = vmatpush.bf16.msra.mxu0 0
        %1185 = vmatpush.bf16.msra.mxu0 0
        %1186 = vmatpush.bf16.msra.mxu0 0
        %1187 = vmatpush.bf16.msra.mxu0 0
        %1188 = vmatpush.bf16.msra.mxu0 %v1108
        %1189 = vmatmul.bf16.gmra.mxu0 %v1090
        %v1190 = vpop.f32.mrf.mxu0
        %v1191 = vadd.f32 0.0, %v1190
        %v1192 = vpop.f32.mrf.mxu0
        %1193 = vdwg.mxu0
        %1194 = vmatpush.bf16.msra.mxu0 0
        %1195 = vmatpush.bf16.msra.mxu0 0
        %1196 = vmatpush.bf16.msra.mxu0 0
        %1197 = vmatpush.bf16.msra.mxu0 0
        %1198 = vmatpush.bf16.msra.mxu0 0
        %1199 = vmatpush.bf16.msra.mxu0 0
        %1200 = vmatpush.bf16.msra.mxu0 0
        %1201 = vmatpush.bf16.msra.mxu0 %v1111
        %1202 = vmatmul.bf16.gmra.mxu0 %v1090
        %v1203 = vpop.f32.mrf.mxu0
        %v1204 = vadd.f32 0.0, %v1203
        %v1205 = vpop.f32.mrf.mxu0
        %1206 = vdwg.mxu0
        %1207 = vmatpush.bf16.msra.mxu0 0
        %1208 = vmatpush.bf16.msra.mxu0 0
        %1209 = vmatpush.bf16.msra.mxu0 0
        %1210 = vmatpush.bf16.msra.mxu0 0
        %1211 = vmatpush.bf16.msra.mxu0 0
        %1212 = vmatpush.bf16.msra.mxu0 0
        %1213 = vmatpush.bf16.msra.mxu0 0
        %1214 = vmatpush.bf16.msra.mxu0 %v1114
        %1215 = vmatmul.bf16.gmra.mxu0 %v1090
        %v1216 = vpop.f32.mrf.mxu0
        %v1217 = vadd.f32 0.0, %v1216
        %v1218 = vpop.f32.mrf.mxu0
        %1219 = vdwg.mxu0
        %v1220 = vadd.f32 %v1042, %v1126
        %v1221 = vadd.f32 %v1043, %v1139
        %v1222 = vadd.f32 %v1044, %v1152
        %v1223 = vadd.f32 %v1045, %v1165
        %v1224 = vadd.f32 %v1046, %v1178
        %v1225 = vadd.f32 %v1047, %v1191
        %v1226 = vadd.f32 %v1048, %v1204
        %v1227 = vadd.f32 %v1049, %v1217
        %s1228 = scalar_lea.vmem %s1, 20
        %v1229 = vld [vmem:[%s1228] sm:$0xf]
        %1230 = vrot.lane.b32.xlu0 %v244, 127
        %v1231 = vpop.permute.xlu0 %1230
        %1232 = vrot.lane.b32.xlu0 %v245, 127
        %v1233 = vpop.permute.xlu0 %1232
        %1234 = vrot.lane.b32.xlu0 %v246, 127
        %v1235 = vpop.permute.xlu0 %1234
        %1236 = vrot.lane.b32.xlu0 %v247, 127
        %v1237 = vpop.permute.xlu0 %1236
        %1238 = vrot.lane.b32.xlu0 %v248, 127
        %v1239 = vpop.permute.xlu0 %1238
        %1240 = vrot.lane.b32.xlu0 %v249, 127
        %v1241 = vpop.permute.xlu0 %1240
        %1242 = vrot.lane.b32.xlu0 %v250, 127
        %v1243 = vpop.permute.xlu0 %1242
        %1244 = vrot.lane.b32.xlu0 %v251, 127
        %v1245 = vpop.permute.xlu0 %1244
        %vm1246 = vcmp.lt.s32.totalorder %v270, 127
        %v1247 = vsel %vm1246, %v1243, %v1245
        %v1248 = vsel %vm1246, %v1241, %v1243
        %v1249 = vsel %vm1246, %v1239, %v1241
        %v1250 = vsel %vm1246, %v1237, %v1239
        %v1251 = vsel %vm1246, %v1235, %v1237
        %v1252 = vsel %vm1246, %v1233, %v1235
        %v1253 = vsel %vm1246, %v1231, %v1233
        %v1254 = vsel %vm1246, %v1245, %v1231
        %s1255 = scalar_lea.vmem [#allocation5], 5
        %v1256 = vld [vmem:[%s1255] ss:$8 sm:$0xf]
        %v1257 = vld [vmem:[%s1255] ss:$8 sm:$0xf0]
        %v1258 = vor.u32 %v1256, %v1257
        %v1260 = vperm.slane %v1258, 0
        %v1261 = vperm.slane %v1258, 1
        %v1262 = vperm.slane %v1258, 2
        %v1263 = vperm.slane %v1258, 3
        %v1264 = vperm.slane %v1258, 4
        %v1265 = vperm.slane %v1258, 5
        %v1266 = vperm.slane %v1258, 6
        %v1267 = vperm.slane %v1258, 7
        %v1276 = vmul.f32 %v1253, %v1260
        %v1277 = vmul.f32 %v1252, %v1261
        %v1278 = vmul.f32 %v1251, %v1262
        %v1279 = vmul.f32 %v1250, %v1263
        %v1280 = vmul.f32 %v1249, %v1264
        %v1281 = vmul.f32 %v1248, %v1265
        %v1282 = vmul.f32 %v1247, %v1266
        %v1283 = vmul.f32 %v1254, %v1267
        %v1284 = vpack.c.bf16 %v1276, %v1276
        %v1285 = vpack.c.bf16 %v1277, %v1277
        %v1286 = vpack.c.bf16 %v1278, %v1278
        %v1287 = vpack.c.bf16 %v1279, %v1279
        %v1288 = vpack.c.bf16 %v1280, %v1280
        %v1289 = vpack.c.bf16 %v1281, %v1281
        %v1290 = vpack.c.bf16 %v1282, %v1282
        %v1291 = vpack.c.bf16 %v1283, %v1283
        %v1293 = vsel %vm380, %v1229, 0
        %v1296 = vsel %vm384, %v1284, 0
        %v1299 = vsel %vm384, %v1285, 0
        %v1302 = vsel %vm384, %v1286, 0
        %v1305 = vsel %vm384, %v1287, 0
        %v1308 = vsel %vm384, %v1288, 0
        %v1311 = vsel %vm384, %v1289, 0
        %v1314 = vsel %vm384, %v1290, 0
        %v1317 = vsel %vm384, %v1291, 0
        %1319 = vmatpush.bf16.msra.mxu0 0
        %1320 = vmatpush.bf16.msra.mxu0 0
        %1321 = vmatpush.bf16.msra.mxu0 0
        %1322 = vmatpush.bf16.msra.mxu0 0
        %1323 = vmatpush.bf16.msra.mxu0 0
        %1324 = vmatpush.bf16.msra.mxu0 0
        %1325 = vmatpush.bf16.msra.mxu0 0
        %1326 = vmatpush.bf16.msra.mxu0 %v1296
        %1327 = vmatmul.bf16.gmra.mxu0 %v1293
        %v1328 = vpop.f32.mrf.mxu0
        %v1329 = vadd.f32 0.0, %v1328
        %v1330 = vpop.f32.mrf.mxu0
        %1331 = vdwg.mxu0
        %1332 = vmatpush.bf16.msra.mxu0 0
        %1333 = vmatpush.bf16.msra.mxu0 0
        %1334 = vmatpush.bf16.msra.mxu0 0
        %1335 = vmatpush.bf16.msra.mxu0 0
        %1336 = vmatpush.bf16.msra.mxu0 0
        %1337 = vmatpush.bf16.msra.mxu0 0
        %1338 = vmatpush.bf16.msra.mxu0 0
        %1339 = vmatpush.bf16.msra.mxu0 %v1299
        %1340 = vmatmul.bf16.gmra.mxu0 %v1293
        %v1341 = vpop.f32.mrf.mxu0
        %v1342 = vadd.f32 0.0, %v1341
        %v1343 = vpop.f32.mrf.mxu0
        %1344 = vdwg.mxu0
        %1345 = vmatpush.bf16.msra.mxu0 0
        %1346 = vmatpush.bf16.msra.mxu0 0
        %1347 = vmatpush.bf16.msra.mxu0 0
        %1348 = vmatpush.bf16.msra.mxu0 0
        %1349 = vmatpush.bf16.msra.mxu0 0
        %1350 = vmatpush.bf16.msra.mxu0 0
        %1351 = vmatpush.bf16.msra.mxu0 0
        %1352 = vmatpush.bf16.msra.mxu0 %v1302
        %1353 = vmatmul.bf16.gmra.mxu0 %v1293
        %v1354 = vpop.f32.mrf.mxu0
        %v1355 = vadd.f32 0.0, %v1354
        %v1356 = vpop.f32.mrf.mxu0
        %1357 = vdwg.mxu0
        %1358 = vmatpush.bf16.msra.mxu0 0
        %1359 = vmatpush.bf16.msra.mxu0 0
        %1360 = vmatpush.bf16.msra.mxu0 0
        %1361 = vmatpush.bf16.msra.mxu0 0
        %1362 = vmatpush.bf16.msra.mxu0 0
        %1363 = vmatpush.bf16.msra.mxu0 0
        %1364 = vmatpush.bf16.msra.mxu0 0
        %1365 = vmatpush.bf16.msra.mxu0 %v1305
        %1366 = vmatmul.bf16.gmra.mxu0 %v1293
        %v1367 = vpop.f32.mrf.mxu0
        %v1368 = vadd.f32 0.0, %v1367
        %v1369 = vpop.f32.mrf.mxu0
        %1370 = vdwg.mxu0
        %1371 = vmatpush.bf16.msra.mxu0 0
        %1372 = vmatpush.bf16.msra.mxu0 0
        %1373 = vmatpush.bf16.msra.mxu0 0
        %1374 = vmatpush.bf16.msra.mxu0 0
        %1375 = vmatpush.bf16.msra.mxu0 0
        %1376 = vmatpush.bf16.msra.mxu0 0
        %1377 = vmatpush.bf16.msra.mxu0 0
        %1378 = vmatpush.bf16.msra.mxu0 %v1308
        %1379 = vmatmul.bf16.gmra.mxu0 %v1293
        %v1380 = vpop.f32.mrf.mxu0
        %v1381 = vadd.f32 0.0, %v1380
        %v1382 = vpop.f32.mrf.mxu0
        %1383 = vdwg.mxu0
        %1384 = vmatpush.bf16.msra.mxu0 0
        %1385 = vmatpush.bf16.msra.mxu0 0
        %1386 = vmatpush.bf16.msra.mxu0 0
        %1387 = vmatpush.bf16.msra.mxu0 0
        %1388 = vmatpush.bf16.msra.mxu0 0
        %1389 = vmatpush.bf16.msra.mxu0 0
        %1390 = vmatpush.bf16.msra.mxu0 0
        %1391 = vmatpush.bf16.msra.mxu0 %v1311
        %1392 = vmatmul.bf16.gmra.mxu0 %v1293
        %v1393 = vpop.f32.mrf.mxu0
        %v1394 = vadd.f32 0.0, %v1393
        %v1395 = vpop.f32.mrf.mxu0
        %1396 = vdwg.mxu0
        %1397 = vmatpush.bf16.msra.mxu0 0
        %1398 = vmatpush.bf16.msra.mxu0 0
        %1399 = vmatpush.bf16.msra.mxu0 0
        %1400 = vmatpush.bf16.msra.mxu0 0
        %1401 = vmatpush.bf16.msra.mxu0 0
        %1402 = vmatpush.bf16.msra.mxu0 0
        %1403 = vmatpush.bf16.msra.mxu0 0
        %1404 = vmatpush.bf16.msra.mxu0 %v1314
        %1405 = vmatmul.bf16.gmra.mxu0 %v1293
        %v1406 = vpop.f32.mrf.mxu0
        %v1407 = vadd.f32 0.0, %v1406
        %v1408 = vpop.f32.mrf.mxu0
        %1409 = vdwg.mxu0
        %1410 = vmatpush.bf16.msra.mxu0 0
        %1411 = vmatpush.bf16.msra.mxu0 0
        %1412 = vmatpush.bf16.msra.mxu0 0
        %1413 = vmatpush.bf16.msra.mxu0 0
        %1414 = vmatpush.bf16.msra.mxu0 0
        %1415 = vmatpush.bf16.msra.mxu0 0
        %1416 = vmatpush.bf16.msra.mxu0 0
        %1417 = vmatpush.bf16.msra.mxu0 %v1317
        %1418 = vmatmul.bf16.gmra.mxu0 %v1293
        %v1419 = vpop.f32.mrf.mxu0
        %v1420 = vadd.f32 0.0, %v1419
        %v1421 = vpop.f32.mrf.mxu0
        %1422 = vdwg.mxu0
        %v1423 = vadd.f32 %v1220, %v1329
        %v1424 = vadd.f32 %v1221, %v1342
        %v1425 = vadd.f32 %v1222, %v1355
        %v1426 = vadd.f32 %v1223, %v1368
        %v1427 = vadd.f32 %v1224, %v1381
        %v1428 = vadd.f32 %v1225, %v1394
        %v1429 = vadd.f32 %v1226, %v1407
        %v1430 = vadd.f32 %v1227, %v1420
        %s1431 = scalar_lea.vmem %s1, 24
        %v1432 = vld [vmem:[%s1431] sm:$0xf]
        %1433 = vrot.lane.b32.xlu0 %v244, 113
        %v1434 = vpop.permute.xlu0 %1433
        %1435 = vrot.lane.b32.xlu0 %v245, 113
        %v1436 = vpop.permute.xlu0 %1435
        %1437 = vrot.lane.b32.xlu0 %v246, 113
        %v1438 = vpop.permute.xlu0 %1437
        %1439 = vrot.lane.b32.xlu0 %v247, 113
        %v1440 = vpop.permute.xlu0 %1439
        %1441 = vrot.lane.b32.xlu0 %v248, 113
        %v1442 = vpop.permute.xlu0 %1441
        %1443 = vrot.lane.b32.xlu0 %v249, 113
        %v1444 = vpop.permute.xlu0 %1443
        %1445 = vrot.lane.b32.xlu0 %v250, 113
        %v1446 = vpop.permute.xlu0 %1445
        %1447 = vrot.lane.b32.xlu0 %v251, 113
        %v1448 = vpop.permute.xlu0 %1447
        %vm1449 = vcmp.lt.s32.totalorder %v270, 113
        %v1450 = vsel %vm1449, %v1446, %v1448
        %v1451 = vsel %vm1449, %v1444, %v1446
        %v1452 = vsel %vm1449, %v1442, %v1444
        %v1453 = vsel %vm1449, %v1440, %v1442
        %v1454 = vsel %vm1449, %v1438, %v1440
        %v1455 = vsel %vm1449, %v1436, %v1438
        %v1456 = vsel %vm1449, %v1434, %v1436
        %v1457 = vsel %vm1449, %v1448, %v1434
        %s1458 = scalar_lea.vmem [#allocation5], 6
        %v1459 = vld [vmem:[%s1458] ss:$8 sm:$0xf]
        %v1460 = vld [vmem:[%s1458] ss:$8 sm:$0xf0]
        %v1461 = vor.u32 %v1459, %v1460
        %v1463 = vperm.slane %v1461, 0
        %v1464 = vperm.slane %v1461, 1
        %v1465 = vperm.slane %v1461, 2
        %v1466 = vperm.slane %v1461, 3
        %v1467 = vperm.slane %v1461, 4
        %v1468 = vperm.slane %v1461, 5
        %v1469 = vperm.slane %v1461, 6
        %v1470 = vperm.slane %v1461, 7
        %v1479 = vmul.f32 %v1456, %v1463
        %v1480 = vmul.f32 %v1455, %v1464
        %v1481 = vmul.f32 %v1454, %v1465
        %v1482 = vmul.f32 %v1453, %v1466
        %v1483 = vmul.f32 %v1452, %v1467
        %v1484 = vmul.f32 %v1451, %v1468
        %v1485 = vmul.f32 %v1450, %v1469
        %v1486 = vmul.f32 %v1457, %v1470
        %v1487 = vpack.c.bf16 %v1479, %v1479
        %v1488 = vpack.c.bf16 %v1480, %v1480
        %v1489 = vpack.c.bf16 %v1481, %v1481
        %v1490 = vpack.c.bf16 %v1482, %v1482
        %v1491 = vpack.c.bf16 %v1483, %v1483
        %v1492 = vpack.c.bf16 %v1484, %v1484
        %v1493 = vpack.c.bf16 %v1485, %v1485
        %v1494 = vpack.c.bf16 %v1486, %v1486
        %v1496 = vsel %vm380, %v1432, 0
        %v1499 = vsel %vm384, %v1487, 0
        %v1502 = vsel %vm384, %v1488, 0
        %v1505 = vsel %vm384, %v1489, 0
        %v1508 = vsel %vm384, %v1490, 0
        %v1511 = vsel %vm384, %v1491, 0
        %v1514 = vsel %vm384, %v1492, 0
        %v1517 = vsel %vm384, %v1493, 0
        %v1520 = vsel %vm384, %v1494, 0
        %1522 = vmatpush.bf16.msra.mxu0 0
        %1523 = vmatpush.bf16.msra.mxu0 0
        %1524 = vmatpush.bf16.msra.mxu0 0
        %1525 = vmatpush.bf16.msra.mxu0 0
        %1526 = vmatpush.bf16.msra.mxu0 0
        %1527 = vmatpush.bf16.msra.mxu0 0
        %1528 = vmatpush.bf16.msra.mxu0 0
        %1529 = vmatpush.bf16.msra.mxu0 %v1499
        %1530 = vmatmul.bf16.gmra.mxu0 %v1496
        %v1531 = vpop.f32.mrf.mxu0
        %v1532 = vadd.f32 0.0, %v1531
        %v1533 = vpop.f32.mrf.mxu0
        %1534 = vdwg.mxu0
        %1535 = vmatpush.bf16.msra.mxu0 0
        %1536 = vmatpush.bf16.msra.mxu0 0
        %1537 = vmatpush.bf16.msra.mxu0 0
        %1538 = vmatpush.bf16.msra.mxu0 0
        %1539 = vmatpush.bf16.msra.mxu0 0
        %1540 = vmatpush.bf16.msra.mxu0 0
        %1541 = vmatpush.bf16.msra.mxu0 0
        %1542 = vmatpush.bf16.msra.mxu0 %v1502
        %1543 = vmatmul.bf16.gmra.mxu0 %v1496
        %v1544 = vpop.f32.mrf.mxu0
        %v1545 = vadd.f32 0.0, %v1544
        %v1546 = vpop.f32.mrf.mxu0
        %1547 = vdwg.mxu0
        %1548 = vmatpush.bf16.msra.mxu0 0
        %1549 = vmatpush.bf16.msra.mxu0 0
        %1550 = vmatpush.bf16.msra.mxu0 0
        %1551 = vmatpush.bf16.msra.mxu0 0
        %1552 = vmatpush.bf16.msra.mxu0 0
        %1553 = vmatpush.bf16.msra.mxu0 0
        %1554 = vmatpush.bf16.msra.mxu0 0
        %1555 = vmatpush.bf16.msra.mxu0 %v1505
        %1556 = vmatmul.bf16.gmra.mxu0 %v1496
        %v1557 = vpop.f32.mrf.mxu0
        %v1558 = vadd.f32 0.0, %v1557
        %v1559 = vpop.f32.mrf.mxu0
        %1560 = vdwg.mxu0
        %1561 = vmatpush.bf16.msra.mxu0 0
        %1562 = vmatpush.bf16.msra.mxu0 0
        %1563 = vmatpush.bf16.msra.mxu0 0
        %1564 = vmatpush.bf16.msra.mxu0 0
        %1565 = vmatpush.bf16.msra.mxu0 0
        %1566 = vmatpush.bf16.msra.mxu0 0
        %1567 = vmatpush.bf16.msra.mxu0 0
        %1568 = vmatpush.bf16.msra.mxu0 %v1508
        %1569 = vmatmul.bf16.gmra.mxu0 %v1496
        %v1570 = vpop.f32.mrf.mxu0
        %v1571 = vadd.f32 0.0, %v1570
        %v1572 = vpop.f32.mrf.mxu0
        %1573 = vdwg.mxu0
        %1574 = vmatpush.bf16.msra.mxu0 0
        %1575 = vmatpush.bf16.msra.mxu0 0
        %1576 = vmatpush.bf16.msra.mxu0 0
        %1577 = vmatpush.bf16.msra.mxu0 0
        %1578 = vmatpush.bf16.msra.mxu0 0
        %1579 = vmatpush.bf16.msra.mxu0 0
        %1580 = vmatpush.bf16.msra.mxu0 0
        %1581 = vmatpush.bf16.msra.mxu0 %v1511
        %1582 = vmatmul.bf16.gmra.mxu0 %v1496
        %v1583 = vpop.f32.mrf.mxu0
        %v1584 = vadd.f32 0.0, %v1583
        %v1585 = vpop.f32.mrf.mxu0
        %1586 = vdwg.mxu0
        %1587 = vmatpush.bf16.msra.mxu0 0
        %1588 = vmatpush.bf16.msra.mxu0 0
        %1589 = vmatpush.bf16.msra.mxu0 0
        %1590 = vmatpush.bf16.msra.mxu0 0
        %1591 = vmatpush.bf16.msra.mxu0 0
        %1592 = vmatpush.bf16.msra.mxu0 0
        %1593 = vmatpush.bf16.msra.mxu0 0
        %1594 = vmatpush.bf16.msra.mxu0 %v1514
        %1595 = vmatmul.bf16.gmra.mxu0 %v1496
        %v1596 = vpop.f32.mrf.mxu0
        %v1597 = vadd.f32 0.0, %v1596
        %v1598 = vpop.f32.mrf.mxu0
        %1599 = vdwg.mxu0
        %1600 = vmatpush.bf16.msra.mxu0 0
        %1601 = vmatpush.bf16.msra.mxu0 0
        %1602 = vmatpush.bf16.msra.mxu0 0
        %1603 = vmatpush.bf16.msra.mxu0 0
        %1604 = vmatpush.bf16.msra.mxu0 0
        %1605 = vmatpush.bf16.msra.mxu0 0
        %1606 = vmatpush.bf16.msra.mxu0 0
        %1607 = vmatpush.bf16.msra.mxu0 %v1517
        %1608 = vmatmul.bf16.gmra.mxu0 %v1496
        %v1609 = vpop.f32.mrf.mxu0
        %v1610 = vadd.f32 0.0, %v1609
        %v1611 = vpop.f32.mrf.mxu0
        %1612 = vdwg.mxu0
        %1613 = vmatpush.bf16.msra.mxu0 0
        %1614 = vmatpush.bf16.msra.mxu0 0
        %1615 = vmatpush.bf16.msra.mxu0 0
        %1616 = vmatpush.bf16.msra.mxu0 0
        %1617 = vmatpush.bf16.msra.mxu0 0
        %1618 = vmatpush.bf16.msra.mxu0 0
        %1619 = vmatpush.bf16.msra.mxu0 0
        %1620 = vmatpush.bf16.msra.mxu0 %v1520
        %1621 = vmatmul.bf16.gmra.mxu0 %v1496
        %v1622 = vpop.f32.mrf.mxu0
        %v1623 = vadd.f32 0.0, %v1622
        %v1624 = vpop.f32.mrf.mxu0
        %1625 = vdwg.mxu0
        %v1626 = vadd.f32 %v1423, %v1532
        %v1627 = vadd.f32 %v1424, %v1545
        %v1628 = vadd.f32 %v1425, %v1558
        %v1629 = vadd.f32 %v1426, %v1571
        %v1630 = vadd.f32 %v1427, %v1584
        %v1631 = vadd.f32 %v1428, %v1597
        %v1632 = vadd.f32 %v1429, %v1610
        %v1633 = vadd.f32 %v1430, %v1623
        %s1634 = scalar_lea.vmem %s1, 28
        %v1635 = vld [vmem:[%s1634] sm:$0xf]
        %1636 = vrot.lane.b32.xlu0 %v244, 112
        %v1637 = vpop.permute.xlu0 %1636
        %1638 = vrot.lane.b32.xlu0 %v245, 112
        %v1639 = vpop.permute.xlu0 %1638
        %1640 = vrot.lane.b32.xlu0 %v246, 112
        %v1641 = vpop.permute.xlu0 %1640
        %1642 = vrot.lane.b32.xlu0 %v247, 112
        %v1643 = vpop.permute.xlu0 %1642
        %1644 = vrot.lane.b32.xlu0 %v248, 112
        %v1645 = vpop.permute.xlu0 %1644
        %1646 = vrot.lane.b32.xlu0 %v249, 112
        %v1647 = vpop.permute.xlu0 %1646
        %1648 = vrot.lane.b32.xlu0 %v250, 112
        %v1649 = vpop.permute.xlu0 %1648
        %1650 = vrot.lane.b32.xlu0 %v251, 112
        %v1651 = vpop.permute.xlu0 %1650
        %vm1652 = vcmp.lt.s32.totalorder %v270, 112
        %v1653 = vsel %vm1652, %v1649, %v1651
        %v1654 = vsel %vm1652, %v1647, %v1649
        %v1655 = vsel %vm1652, %v1645, %v1647
        %v1656 = vsel %vm1652, %v1643, %v1645
        %v1657 = vsel %vm1652, %v1641, %v1643
        %v1658 = vsel %vm1652, %v1639, %v1641
        %v1659 = vsel %vm1652, %v1637, %v1639
        %v1660 = vsel %vm1652, %v1651, %v1637
        %s1661 = scalar_lea.vmem [#allocation5], 7
        %v1662 = vld [vmem:[%s1661] ss:$8 sm:$0xf]
        %v1663 = vld [vmem:[%s1661] ss:$8 sm:$0xf0]
        %v1664 = vor.u32 %v1662, %v1663
        %v1666 = vperm.slane %v1664, 0
        %v1667 = vperm.slane %v1664, 1
        %v1668 = vperm.slane %v1664, 2
        %v1669 = vperm.slane %v1664, 3
        %v1670 = vperm.slane %v1664, 4
        %v1671 = vperm.slane %v1664, 5
        %v1672 = vperm.slane %v1664, 6
        %v1673 = vperm.slane %v1664, 7
        %v1682 = vmul.f32 %v1659, %v1666
        %v1683 = vmul.f32 %v1658, %v1667
        %v1684 = vmul.f32 %v1657, %v1668
        %v1685 = vmul.f32 %v1656, %v1669
        %v1686 = vmul.f32 %v1655, %v1670
        %v1687 = vmul.f32 %v1654, %v1671
        %v1688 = vmul.f32 %v1653, %v1672
        %v1689 = vmul.f32 %v1660, %v1673
        %v1690 = vpack.c.bf16 %v1682, %v1682
        %v1691 = vpack.c.bf16 %v1683, %v1683
        %v1692 = vpack.c.bf16 %v1684, %v1684
        %v1693 = vpack.c.bf16 %v1685, %v1685
        %v1694 = vpack.c.bf16 %v1686, %v1686
        %v1695 = vpack.c.bf16 %v1687, %v1687
        %v1696 = vpack.c.bf16 %v1688, %v1688
        %v1697 = vpack.c.bf16 %v1689, %v1689
        %v1699 = vsel %vm380, %v1635, 0
        %v1702 = vsel %vm384, %v1690, 0
        %v1705 = vsel %vm384, %v1691, 0
        %v1708 = vsel %vm384, %v1692, 0
        %v1711 = vsel %vm384, %v1693, 0
        %v1714 = vsel %vm384, %v1694, 0
        %v1717 = vsel %vm384, %v1695, 0
        %v1720 = vsel %vm384, %v1696, 0
        %v1723 = vsel %vm384, %v1697, 0
        %1725 = vmatpush.bf16.msra.mxu0 0
        %1726 = vmatpush.bf16.msra.mxu0 0
        %1727 = vmatpush.bf16.msra.mxu0 0
        %1728 = vmatpush.bf16.msra.mxu0 0
        %1729 = vmatpush.bf16.msra.mxu0 0
        %1730 = vmatpush.bf16.msra.mxu0 0
        %1731 = vmatpush.bf16.msra.mxu0 0
        %1732 = vmatpush.bf16.msra.mxu0 %v1702
        %1733 = vmatmul.bf16.gmra.mxu0 %v1699
        %v1734 = vpop.f32.mrf.mxu0
        %v1735 = vadd.f32 0.0, %v1734
        %v1736 = vpop.f32.mrf.mxu0
        %1737 = vdwg.mxu0
        %1738 = vmatpush.bf16.msra.mxu0 0
        %1739 = vmatpush.bf16.msra.mxu0 0
        %1740 = vmatpush.bf16.msra.mxu0 0
        %1741 = vmatpush.bf16.msra.mxu0 0
        %1742 = vmatpush.bf16.msra.mxu0 0
        %1743 = vmatpush.bf16.msra.mxu0 0
        %1744 = vmatpush.bf16.msra.mxu0 0
        %1745 = vmatpush.bf16.msra.mxu0 %v1705
        %1746 = vmatmul.bf16.gmra.mxu0 %v1699
        %v1747 = vpop.f32.mrf.mxu0
        %v1748 = vadd.f32 0.0, %v1747
        %v1749 = vpop.f32.mrf.mxu0
        %1750 = vdwg.mxu0
        %1751 = vmatpush.bf16.msra.mxu0 0
        %1752 = vmatpush.bf16.msra.mxu0 0
        %1753 = vmatpush.bf16.msra.mxu0 0
        %1754 = vmatpush.bf16.msra.mxu0 0
        %1755 = vmatpush.bf16.msra.mxu0 0
        %1756 = vmatpush.bf16.msra.mxu0 0
        %1757 = vmatpush.bf16.msra.mxu0 0
        %1758 = vmatpush.bf16.msra.mxu0 %v1708
        %1759 = vmatmul.bf16.gmra.mxu0 %v1699
        %v1760 = vpop.f32.mrf.mxu0
        %v1761 = vadd.f32 0.0, %v1760
        %v1762 = vpop.f32.mrf.mxu0
        %1763 = vdwg.mxu0
        %1764 = vmatpush.bf16.msra.mxu0 0
        %1765 = vmatpush.bf16.msra.mxu0 0
        %1766 = vmatpush.bf16.msra.mxu0 0
        %1767 = vmatpush.bf16.msra.mxu0 0
        %1768 = vmatpush.bf16.msra.mxu0 0
        %1769 = vmatpush.bf16.msra.mxu0 0
        %1770 = vmatpush.bf16.msra.mxu0 0
        %1771 = vmatpush.bf16.msra.mxu0 %v1711
        %1772 = vmatmul.bf16.gmra.mxu0 %v1699
        %v1773 = vpop.f32.mrf.mxu0
        %v1774 = vadd.f32 0.0, %v1773
        %v1775 = vpop.f32.mrf.mxu0
        %1776 = vdwg.mxu0
        %1777 = vmatpush.bf16.msra.mxu0 0
        %1778 = vmatpush.bf16.msra.mxu0 0
        %1779 = vmatpush.bf16.msra.mxu0 0
        %1780 = vmatpush.bf16.msra.mxu0 0
        %1781 = vmatpush.bf16.msra.mxu0 0
        %1782 = vmatpush.bf16.msra.mxu0 0
        %1783 = vmatpush.bf16.msra.mxu0 0
        %1784 = vmatpush.bf16.msra.mxu0 %v1714
        %1785 = vmatmul.bf16.gmra.mxu0 %v1699
        %v1786 = vpop.f32.mrf.mxu0
        %v1787 = vadd.f32 0.0, %v1786
        %v1788 = vpop.f32.mrf.mxu0
        %1789 = vdwg.mxu0
        %1790 = vmatpush.bf16.msra.mxu0 0
        %1791 = vmatpush.bf16.msra.mxu0 0
        %1792 = vmatpush.bf16.msra.mxu0 0
        %1793 = vmatpush.bf16.msra.mxu0 0
        %1794 = vmatpush.bf16.msra.mxu0 0
        %1795 = vmatpush.bf16.msra.mxu0 0
        %1796 = vmatpush.bf16.msra.mxu0 0
        %1797 = vmatpush.bf16.msra.mxu0 %v1717
        %1798 = vmatmul.bf16.gmra.mxu0 %v1699
        %v1799 = vpop.f32.mrf.mxu0
        %v1800 = vadd.f32 0.0, %v1799
        %v1801 = vpop.f32.mrf.mxu0
        %1802 = vdwg.mxu0
        %1803 = vmatpush.bf16.msra.mxu0 0
        %1804 = vmatpush.bf16.msra.mxu0 0
        %1805 = vmatpush.bf16.msra.mxu0 0
        %1806 = vmatpush.bf16.msra.mxu0 0
        %1807 = vmatpush.bf16.msra.mxu0 0
        %1808 = vmatpush.bf16.msra.mxu0 0
        %1809 = vmatpush.bf16.msra.mxu0 0
        %1810 = vmatpush.bf16.msra.mxu0 %v1720
        %1811 = vmatmul.bf16.gmra.mxu0 %v1699
        %v1812 = vpop.f32.mrf.mxu0
        %v1813 = vadd.f32 0.0, %v1812
        %v1814 = vpop.f32.mrf.mxu0
        %1815 = vdwg.mxu0
        %1816 = vmatpush.bf16.msra.mxu0 0
        %1817 = vmatpush.bf16.msra.mxu0 0
        %1818 = vmatpush.bf16.msra.mxu0 0
        %1819 = vmatpush.bf16.msra.mxu0 0
        %1820 = vmatpush.bf16.msra.mxu0 0
        %1821 = vmatpush.bf16.msra.mxu0 0
        %1822 = vmatpush.bf16.msra.mxu0 0
        %1823 = vmatpush.bf16.msra.mxu0 %v1723
        %1824 = vmatmul.bf16.gmra.mxu0 %v1699
        %v1825 = vpop.f32.mrf.mxu0
        %v1826 = vadd.f32 0.0, %v1825
        %v1827 = vpop.f32.mrf.mxu0
        %1828 = vdwg.mxu0
        %v1829 = vadd.f32 %v1626, %v1735
        %v1830 = vadd.f32 %v1627, %v1748
        %v1831 = vadd.f32 %v1628, %v1761
        %v1832 = vadd.f32 %v1629, %v1774
        %v1833 = vadd.f32 %v1630, %v1787
        %v1834 = vadd.f32 %v1631, %v1800
        %v1835 = vadd.f32 %v1632, %v1813
        %v1836 = vadd.f32 %v1633, %v1826
        %s1837 = scalar_lea.vmem %s1, 32
        %v1838 = vld [vmem:[%s1837] sm:$0xf]
        %1839 = vrot.lane.b32.xlu0 %v244, 111
        %v1840 = vpop.permute.xlu0 %1839
        %1841 = vrot.lane.b32.xlu0 %v245, 111
        %v1842 = vpop.permute.xlu0 %1841
        %1843 = vrot.lane.b32.xlu0 %v246, 111
        %v1844 = vpop.permute.xlu0 %1843
        %1845 = vrot.lane.b32.xlu0 %v247, 111
        %v1846 = vpop.permute.xlu0 %1845
        %1847 = vrot.lane.b32.xlu0 %v248, 111
        %v1848 = vpop.permute.xlu0 %1847
        %1849 = vrot.lane.b32.xlu0 %v249, 111
        %v1850 = vpop.permute.xlu0 %1849
        %1851 = vrot.lane.b32.xlu0 %v250, 111
        %v1852 = vpop.permute.xlu0 %1851
        %1853 = vrot.lane.b32.xlu0 %v251, 111
        %v1854 = vpop.permute.xlu0 %1853
        %vm1855 = vcmp.lt.s32.totalorder %v270, 111
        %v1856 = vsel %vm1855, %v1852, %v1854
        %v1857 = vsel %vm1855, %v1850, %v1852
        %v1858 = vsel %vm1855, %v1848, %v1850
        %v1859 = vsel %vm1855, %v1846, %v1848
        %v1860 = vsel %vm1855, %v1844, %v1846
        %v1861 = vsel %vm1855, %v1842, %v1844
        %v1862 = vsel %vm1855, %v1840, %v1842
        %v1863 = vsel %vm1855, %v1854, %v1840
        %s1864 = scalar_lea.vmem [#allocation5], 64
        %v1865 = vld [vmem:[%s1864] ss:$8 sm:$0xf]
        %v1866 = vld [vmem:[%s1864] ss:$8 sm:$0xf0]
        %v1867 = vor.u32 %v1865, %v1866
        %v1869 = vperm.slane %v1867, 0
        %v1870 = vperm.slane %v1867, 1
        %v1871 = vperm.slane %v1867, 2
        %v1872 = vperm.slane %v1867, 3
        %v1873 = vperm.slane %v1867, 4
        %v1874 = vperm.slane %v1867, 5
        %v1875 = vperm.slane %v1867, 6
        %v1876 = vperm.slane %v1867, 7
        %v1885 = vmul.f32 %v1862, %v1869
        %v1886 = vmul.f32 %v1861, %v1870
        %v1887 = vmul.f32 %v1860, %v1871
        %v1888 = vmul.f32 %v1859, %v1872
        %v1889 = vmul.f32 %v1858, %v1873
        %v1890 = vmul.f32 %v1857, %v1874
        %v1891 = vmul.f32 %v1856, %v1875
        %v1892 = vmul.f32 %v1863, %v1876
        %v1893 = vpack.c.bf16 %v1885, %v1885
        %v1894 = vpack.c.bf16 %v1886, %v1886
        %v1895 = vpack.c.bf16 %v1887, %v1887
        %v1896 = vpack.c.bf16 %v1888, %v1888
        %v1897 = vpack.c.bf16 %v1889, %v1889
        %v1898 = vpack.c.bf16 %v1890, %v1890
        %v1899 = vpack.c.bf16 %v1891, %v1891
        %v1900 = vpack.c.bf16 %v1892, %v1892
        %v1902 = vsel %vm380, %v1838, 0
        %v1905 = vsel %vm384, %v1893, 0
        %v1908 = vsel %vm384, %v1894, 0
        %v1911 = vsel %vm384, %v1895, 0
        %v1914 = vsel %vm384, %v1896, 0
        %v1917 = vsel %vm384, %v1897, 0
        %v1920 = vsel %vm384, %v1898, 0
        %v1923 = vsel %vm384, %v1899, 0
        %v1926 = vsel %vm384, %v1900, 0
        %1928 = vmatpush.bf16.msra.mxu0 0
        %1929 = vmatpush.bf16.msra.mxu0 0
        %1930 = vmatpush.bf16.msra.mxu0 0
        %1931 = vmatpush.bf16.msra.mxu0 0
        %1932 = vmatpush.bf16.msra.mxu0 0
        %1933 = vmatpush.bf16.msra.mxu0 0
        %1934 = vmatpush.bf16.msra.mxu0 0
        %1935 = vmatpush.bf16.msra.mxu0 %v1905
        %1936 = vmatmul.bf16.gmra.mxu0 %v1902
        %v1937 = vpop.f32.mrf.mxu0
        %v1938 = vadd.f32 0.0, %v1937
        %v1939 = vpop.f32.mrf.mxu0
        %1940 = vdwg.mxu0
        %1941 = vmatpush.bf16.msra.mxu0 0
        %1942 = vmatpush.bf16.msra.mxu0 0
        %1943 = vmatpush.bf16.msra.mxu0 0
        %1944 = vmatpush.bf16.msra.mxu0 0
        %1945 = vmatpush.bf16.msra.mxu0 0
        %1946 = vmatpush.bf16.msra.mxu0 0
        %1947 = vmatpush.bf16.msra.mxu0 0
        %1948 = vmatpush.bf16.msra.mxu0 %v1908
        %1949 = vmatmul.bf16.gmra.mxu0 %v1902
        %v1950 = vpop.f32.mrf.mxu0
        %v1951 = vadd.f32 0.0, %v1950
        %v1952 = vpop.f32.mrf.mxu0
        %1953 = vdwg.mxu0
        %1954 = vmatpush.bf16.msra.mxu0 0
        %1955 = vmatpush.bf16.msra.mxu0 0
        %1956 = vmatpush.bf16.msra.mxu0 0
        %1957 = vmatpush.bf16.msra.mxu0 0
        %1958 = vmatpush.bf16.msra.mxu0 0
        %1959 = vmatpush.bf16.msra.mxu0 0
        %1960 = vmatpush.bf16.msra.mxu0 0
        %1961 = vmatpush.bf16.msra.mxu0 %v1911
        %1962 = vmatmul.bf16.gmra.mxu0 %v1902
        %v1963 = vpop.f32.mrf.mxu0
        %v1964 = vadd.f32 0.0, %v1963
        %v1965 = vpop.f32.mrf.mxu0
        %1966 = vdwg.mxu0
        %1967 = vmatpush.bf16.msra.mxu0 0
        %1968 = vmatpush.bf16.msra.mxu0 0
        %1969 = vmatpush.bf16.msra.mxu0 0
        %1970 = vmatpush.bf16.msra.mxu0 0
        %1971 = vmatpush.bf16.msra.mxu0 0
        %1972 = vmatpush.bf16.msra.mxu0 0
        %1973 = vmatpush.bf16.msra.mxu0 0
        %1974 = vmatpush.bf16.msra.mxu0 %v1914
        %1975 = vmatmul.bf16.gmra.mxu0 %v1902
        %v1976 = vpop.f32.mrf.mxu0
        %v1977 = vadd.f32 0.0, %v1976
        %v1978 = vpop.f32.mrf.mxu0
        %1979 = vdwg.mxu0
        %1980 = vmatpush.bf16.msra.mxu0 0
        %1981 = vmatpush.bf16.msra.mxu0 0
        %1982 = vmatpush.bf16.msra.mxu0 0
        %1983 = vmatpush.bf16.msra.mxu0 0
        %1984 = vmatpush.bf16.msra.mxu0 0
        %1985 = vmatpush.bf16.msra.mxu0 0
        %1986 = vmatpush.bf16.msra.mxu0 0
        %1987 = vmatpush.bf16.msra.mxu0 %v1917
        %1988 = vmatmul.bf16.gmra.mxu0 %v1902
        %v1989 = vpop.f32.mrf.mxu0
        %v1990 = vadd.f32 0.0, %v1989
        %v1991 = vpop.f32.mrf.mxu0
        %1992 = vdwg.mxu0
        %1993 = vmatpush.bf16.msra.mxu0 0
        %1994 = vmatpush.bf16.msra.mxu0 0
        %1995 = vmatpush.bf16.msra.mxu0 0
        %1996 = vmatpush.bf16.msra.mxu0 0
        %1997 = vmatpush.bf16.msra.mxu0 0
        %1998 = vmatpush.bf16.msra.mxu0 0
        %1999 = vmatpush.bf16.msra.mxu0 0
        %2000 = vmatpush.bf16.msra.mxu0 %v1920
        %2001 = vmatmul.bf16.gmra.mxu0 %v1902
        %v2002 = vpop.f32.mrf.mxu0
        %v2003 = vadd.f32 0.0, %v2002
        %v2004 = vpop.f32.mrf.mxu0
        %2005 = vdwg.mxu0
        %2006 = vmatpush.bf16.msra.mxu0 0
        %2007 = vmatpush.bf16.msra.mxu0 0
        %2008 = vmatpush.bf16.msra.mxu0 0
        %2009 = vmatpush.bf16.msra.mxu0 0
        %2010 = vmatpush.bf16.msra.mxu0 0
        %2011 = vmatpush.bf16.msra.mxu0 0
        %2012 = vmatpush.bf16.msra.mxu0 0
        %2013 = vmatpush.bf16.msra.mxu0 %v1923
        %2014 = vmatmul.bf16.gmra.mxu0 %v1902
        %v2015 = vpop.f32.mrf.mxu0
        %v2016 = vadd.f32 0.0, %v2015
        %v2017 = vpop.f32.mrf.mxu0
        %2018 = vdwg.mxu0
        %2019 = vmatpush.bf16.msra.mxu0 0
        %2020 = vmatpush.bf16.msra.mxu0 0
        %2021 = vmatpush.bf16.msra.mxu0 0
        %2022 = vmatpush.bf16.msra.mxu0 0
        %2023 = vmatpush.bf16.msra.mxu0 0
        %2024 = vmatpush.bf16.msra.mxu0 0
        %2025 = vmatpush.bf16.msra.mxu0 0
        %2026 = vmatpush.bf16.msra.mxu0 %v1926
        %2027 = vmatmul.bf16.gmra.mxu0 %v1902
        %v2028 = vpop.f32.mrf.mxu0
        %v2029 = vadd.f32 0.0, %v2028
        %v2030 = vpop.f32.mrf.mxu0
        %2031 = vdwg.mxu0
        %v2032 = vadd.f32 %v1829, %v1938
        %v2033 = vadd.f32 %v1830, %v1951
        %v2034 = vadd.f32 %v1831, %v1964
        %v2035 = vadd.f32 %v1832, %v1977
        %v2036 = vadd.f32 %v1833, %v1990
        %v2037 = vadd.f32 %v1834, %v2003
        %v2038 = vadd.f32 %v1835, %v2016
        %v2039 = vadd.f32 %v1836, %v2029
        %v2040 = vld [vmem:[%s2] sm:$0xff]
        %2042 = vset.pattern.permute.xlu0 0
        %2043 = vperm.xlu0 %2042, %v2040
        %v2044 = vpop.permute.xlu0 %2043
        %v2046 = vadd.f32 %v2032, %v2044
        %v2047 = vadd.f32 %v2033, %v2044
        %v2048 = vadd.f32 %v2034, %v2044
        %v2049 = vadd.f32 %v2035, %v2044
        %v2050 = vadd.f32 %v2036, %v2044
        %v2051 = vadd.f32 %v2037, %v2044
        %v2052 = vadd.f32 %v2038, %v2044
        %v2053 = vadd.f32 %v2039, %v2044
        %2054 = vst [vmem:[%s232] sm:$0xff] %v2046
        %2055 = vst [vmem:[%s232 + $0x8] sm:$0xff] %v2047
        %2056 = vst [vmem:[%s232 + $0x10] sm:$0xff] %v2048
        %2057 = vst [vmem:[%s232 + $0x18] sm:$0xff] %v2049
        %2058 = vst [vmem:[%s232 + $0x20] sm:$0xff] %v2050
        %2059 = vst [vmem:[%s232 + $0x28] sm:$0xff] %v2051
        %2060 = vst [vmem:[%s232 + $0x30] sm:$0xff] %v2052
        %2061 = vst [vmem:[%s232 + $0x38] sm:$0xff] %v2053
        %s2062 = sand.u32 %s119, 1
        %s2063 = scalar_lea.sflag [#allocation4], %s2062
        %s2064 = sand.u32 %s119, 1
        %s2065 = smul.addr %s2064, 64
        %s2066 = scalar_lea.vmem [#allocation7], %s2065
        // Predicated region
        $region45: #{tpu_custom_call.1} parent=35 // pred_check
          %p2067 = pneg %p129
        $region46: #{tpu_custom_call.1} parent=35 // pred_check_branch
          %2069 = sbr.rel (%p2067) target = $region48
        $region47: #{tpu_custom_call.1} parent=35 // pred_region
          %s2070 = smul.u32 8, %s22
          %2072 = vsyncadd %s2063, 0
          %s2073 = smul.addr %s2070, 8
          %s2074 = scalar_lea.hbm %s4, %s2073
          %s2076 = sshll.u32 %s2066, 4
          %s2077 = int_to_ptr.vmem [resolvable:$true] %s2076
          %s2078 = sshll.u32 %s2074, 4
          %s2079 = int_to_ptr.hbm [resolvable:$true] %s2078
          %2081 = dma.vmem_to_hbm [thread:$0]  %s2077, 1024, %s2079, %s2063
        $region48: #{tpu_custom_call.1} parent=35 // pred_fallthru
          _
      $region36: #{tpu_custom_call.1} parent=5 // pred_fallthru
        _
      %p2082 = scmp.le.s32.totalorder 2, %s17
      // Predicated region
      $region49: #{tpu_custom_call.1} parent=5 // pred_check
        %p2083 = pneg %p2082
      $region50: #{tpu_custom_call.1} parent=5 // pred_check_branch
        %2085 = sbr.rel (%p2083) target = $region52
      $region51: #{tpu_custom_call.1} parent=5 // pred_region
        %s2086 = ssub.s32 %s17, 2
        // Predicated region
        $region53: #{tpu_custom_call.1} parent=51 // pred_check
          %p2087 = pneg %p135
        $region54: #{tpu_custom_call.1} parent=51 // pred_check_branch
          %2089 = sbr.rel (%p2087) target = $region56
        $region55: #{tpu_custom_call.1} parent=51 // pred_region
          %s2090 = sand.u32 %s120, 1
          %s2091 = scalar_lea.sflag [#allocation4], %s2090
          %s2092 = sand.u32 %s120, 1
          %s2093 = smul.addr %s2092, 64
          %s2094 = scalar_lea.vmem [#allocation7], %s2093
          %2096 = dma.done %s2091, 1024
        $region56: #{tpu_custom_call.1} parent=51 // pred_fallthru
          _
      $region52: #{tpu_custom_call.1} parent=5 // pred_fallthru
        _
    $region6: #{tpu_custom_call.1} parent=1 // loop_footer
      %s21 = sadd.s32 1, %s17
    $region7: #{tpu_custom_call.1} parent=1 // loop_footer_branch
      %16 = sbr.rel target = $region3
    $region8: #{tpu_custom_call.1} parent=1 // loop_exit
      _
    %2097 = vsyncpa [#allocation3], 1
    %s2098 = scalar_lea.sflag [#allocation3], 1
    %2099 = vsyncpa %s2098, 1
    %2100 = vsyncpa [#allocation6], 1
    %2101 = vsyncpa [#allocation4], 1
    %s2102 = scalar_lea.sflag [#allocation4], 1
    %2103 = vsyncpa %s2102, 1

</llo_original>
